<compile_context>
chip_gen: v7x
topology: tpu7x:2x2x1
jax: 0.10.0
libtpu: 0.0.40
codegen_flags: <defaults>
</compile_context>

<pallas_src>
import jax
import jax.numpy as jnp
from jax import lax
from jax.experimental import pallas as pl
from jax.experimental.pallas import tpu as pltpu

_BN_EPS = 1e-5


def _round_up(x, m):
    return (x + m - 1) // m * m


# ----------------------------------------------------------------------------
# Frozen ResNet18 feature extractor (plain JAX, eval mode, no grad).
# Weights are deterministic random (torchvision weights=None); fresh BN layers
# keep running stats mean=0 / var=1, gamma=1 / beta=0.
# ----------------------------------------------------------------------------
def _fe_bn(x):
    return x * (1.0 / jnp.sqrt(1.0 + _BN_EPS))


def _conv2d(x, w, stride, pad):
    return lax.conv_general_dilated(
        x, w, (stride, stride), [(pad, pad), (pad, pad)],
        dimension_numbers=("NCHW", "OIHW", "NCHW"))


def _maxpool_3x3_s2(x):
    return lax.reduce_window(
        x, -jnp.inf, lax.max,
        (1, 1, 3, 3), (1, 1, 2, 2), [(0, 0), (0, 0), (1, 1), (1, 1)])


def _basic_block(x, bp, stride):
    out = jax.nn.relu(_fe_bn(_conv2d(x, bp["conv1"], stride, 1)))
    out = _fe_bn(_conv2d(out, bp["conv2"], 1, 1))
    if "down" in bp:
        ident = _fe_bn(_conv2d(x, bp["down"], stride, 0))
    else:
        ident = x
    return jax.nn.relu(out + ident)


def resnet18_features(x, fp):
    x = jax.nn.relu(_fe_bn(_conv2d(x, fp["conv1"], 2, 3)))
    x = _maxpool_3x3_s2(x)
    for name, stride in (("layer1", 1), ("layer2", 2), ("layer3", 2), ("layer4", 2)):
        blocks = fp[name]
        x = _basic_block(x, blocks[0], stride)
        x = _basic_block(x, blocks[1], 1)
    return jnp.mean(x, axis=(2, 3))  # AdaptiveAvgPool2d((1,1)) + flatten -> (B, 512)


def init_resnet18_params(key):
    keys = iter(jax.random.split(key, 64))

    def conv(shape):
        fan_in = shape[1] * shape[2] * shape[3]
        std = (2.0 / fan_in) ** 0.5
        return jax.random.normal(next(keys), shape, jnp.float32) * std

    def block(c_in, c_out, downsample):
        b = {"conv1": conv((c_out, c_in, 3, 3)),
             "conv2": conv((c_out, c_out, 3, 3))}
        if downsample:
            b["down"] = conv((c_out, c_in, 1, 1))
        return b

    return {
        "conv1": conv((64, 3, 7, 7)),
        "layer1": [block(64, 64, False), block(64, 64, False)],
        "layer2": [block(64, 128, True), block(128, 128, False)],
        "layer3": [block(128, 256, True), block(256, 256, False)],
        "layer4": [block(256, 512, True), block(512, 512, False)],
    }


# ----------------------------------------------------------------------------
# SEA MLP parameter init: logical PyTorch shapes/init, zero-padded to
# lane-aligned sizes, matmul weights cast to bf16, packed into:
#   cdp_stack (wc3|wc2)  -> auto-DMA'd VMEM input (needed immediately)
#   wc1, ts_stack        -> HBM inputs, manually DMA'd behind the CDP chain
# ----------------------------------------------------------------------------
def init_sea_params(key, symbol_size, dim=512):
    assert dim % 128 == 0
    hid, hid_pad = 100, 128
    sym_pad = _round_up(symbol_size, 128)
    out_pad = 128  # logical output width is 2

    ks = jax.random.split(key, 6)

    def lin(k, fan_in, fan_out):
        # PyTorch nn.Linear default init U(-1/sqrt(fan_in), 1/sqrt(fan_in)),
        # stored pre-transposed as (in, out) so the kernel computes x @ W.
        bound = 1.0 / (fan_in ** 0.5)
        return jax.random.uniform(k, (fan_in, fan_out), jnp.float32, -bound, bound)

    def pad2(a, rows, cols):
        return jnp.pad(a, ((0, rows - a.shape[0]), (0, cols - a.shape[1])))

    wc3 = pad2(lin(ks[0], symbol_size, hid), sym_pad, hid_pad)   # cdp_fc3
    wc2 = pad2(lin(ks[1], hid, hid), hid_pad, hid_pad)           # cdp_fc2
    wc1 = pad2(lin(ks[2], hid, dim), hid_pad, dim)               # cdp_fc1
    wt1 = pad2(lin(ks[3], dim, hid), dim, hid_pad)               # ts_fc1
    wt2 = pad2(lin(ks[4], hid, hid), hid_pad, hid_pad)           # ts_fc2
    wt3 = pad2(lin(ks[5], hid, 2), hid_pad, out_pad)             # ts_fc3

    cdp_stack = jnp.concatenate([wc3, wc2], axis=0).astype(jnp.bfloat16)   # (sym_pad+128, 128)
    ts_stack = jnp.concatenate([wt1, wt2, wt3], axis=0).astype(jnp.bfloat16)  # (dim+256, 128)
    wc1 = wc1.astype(jnp.bfloat16)                                          # (128, dim)

    # Packed BN affine: row 0 = gamma, row 1 = beta, lanes = [c3|c2|c1|t1|t2].
    # PyTorch defaults gamma=1 / beta=0; padded lanes MUST keep beta=0.
    gb_width = hid_pad + hid_pad + dim + hid_pad + hid_pad
    gb = jnp.concatenate([jnp.ones((1, gb_width), jnp.float32),
                          jnp.zeros((1, gb_width), jnp.float32)], axis=0)

    return {"cdp_stack": cdp_stack, "ts_stack": ts_stack, "wc1": wc1, "gb": gb,
            "sym_pad": sym_pad, "hid_pad": hid_pad, "dim": dim, "out_pad": out_pad}


# ----------------------------------------------------------------------------
# Pallas kernel: bidirectional SEA MLP (CDP symbol path + TS feature path).
# ----------------------------------------------------------------------------
def sea_mlp(feat, symbol, p):
    B = feat.shape[0]
    B_pad = max(16, _round_up(B, 16))  # native bf16 (16,128) packed tile
    sym_pad, hid_pad, dim, out_pad = p["sym_pad"], p["hid_pad"], p["dim"], p["out_pad"]

    # feat/symbol are only ever MXU operands: ship them as bf16 (halves DMA bytes).
    feat_p = jnp.pad(feat, ((0, B_pad - B), (0, 0))).astype(jnp.bfloat16)
    sym_p = jnp.pad(symbol, ((0, B_pad - B),
                             (0, sym_pad - symbol.shape[1]))).astype(jnp.bfloat16)

    # Static row offsets inside the packed weight stacks.
    o_wc3 = 0
    o_wc2 = o_wc3 + sym_pad
    o_wt1 = 0
    o_wt2 = o_wt1 + dim
    o_wt3 = o_wt2 + hid_pad

    # Static lane offsets inside the packed gamma/beta array.
    g_c3 = 0
    g_c2 = g_c3 + hid_pad
    g_c1 = g_c2 + hid_pad
    g_t1 = g_c1 + dim
    g_t2 = g_t1 + hid_pad

    inv_b = 1.0 / float(B)
    eps = _BN_EPS

    def kernel(feat_ref, sym_ref, cdp_ref, gb_ref, wc1_hbm, ts_hbm, out_ref,
               wc1_buf, ts_buf, sem):
        # Kick off the wc1 / TS-stack weight DMAs immediately; they overlap the
        # CDP chain (2 matmuls + 2 BN + 2 sigmoids) and are waited on lazily.
        cp_wc1 = pltpu.make_async_copy(wc1_hbm, wc1_buf, sem.at[0])
        cp_ts = pltpu.make_async_copy(ts_hbm, ts_buf, sem.at[1])
        cp_wc1.start()
        cp_ts.start()

        # Row-validity mask: train-mode BN statistics use only the real batch.
        row = lax.broadcasted_iota(jnp.int32, (B_pad, 1), 0)
        mask = (row < B).astype(jnp.float32)

        def bn(x, off, width):
            # One-pass batch stats (masked), folded into scale/shift.
            g = gb_ref[0:1, off:off + width]
            b = gb_ref[1:2, off:off + width]
            xm = x * mask
            # Single cross-sublane reduce for sum and sum-of-squares.
            s = jnp.sum(jnp.concatenate([xm, xm * x], axis=1),
                        axis=0, keepdims=True) * inv_b
            mu = s[:, :width]
            var = jnp.maximum(s[:, width:] - mu * mu, 0.0)  # clamp f32 cancellation
            scale = g * lax.rsqrt(var + eps)
            shift = b - mu * scale
            return x * scale + shift

        def mm(a, w):
            # bf16 MXU operands, f32 accumulation.
            return jnp.dot(a.astype(jnp.bfloat16), w,
                           preferred_element_type=jnp.float32)

        # --- CDP path: symbol -> sigmoid gates ---
        sym = sym_ref[...]
        s3 = jax.nn.sigmoid(bn(mm(sym, cdp_ref[o_wc3:o_wc3 + sym_pad, :]),
                               g_c3, hid_pad))                       # (B_pad, 128)
        s2 = jax.nn.sigmoid(bn(mm(s3, cdp_ref[o_wc2:o_wc2 + hid_pad, :]),
                               g_c2, hid_pad))                       # (B_pad, 128)
        cp_wc1.wait()
        s1 = jax.nn.sigmoid(bn(mm(s2, wc1_buf[...]), g_c1, dim))     # (B_pad, 512)

        # --- TS path: features gated by CDP outputs ---
        h = feat_ref[...].astype(jnp.float32) * s1
        cp_ts.wait()
        h = jax.nn.relu(bn(mm(h, ts_buf[o_wt1:o_wt1 + dim, :]),
                           g_t1, hid_pad))                           # (B_pad, 128)
        h = h * s2
        h = jax.nn.relu(bn(mm(h, ts_buf[o_wt2:o_wt2 + hid_pad, :]),
                           g_t2, hid_pad))                           # (B_pad, 128)
        h = h * s3
        out_ref[...] = mm(h, ts_buf[o_wt3:o_wt3 + hid_pad, :])       # (B_pad, 128)

    vmem = pl.BlockSpec(memory_space=pltpu.MemorySpace.VMEM)
    hbm = pl.BlockSpec(memory_space=pl.ANY)
    out = pl.pallas_call(
        kernel,
        out_shape=jax.ShapeDtypeStruct((B_pad, out_pad), jnp.float32),
        in_specs=[vmem, vmem, vmem, vmem, hbm, hbm],
        out_specs=vmem,
        scratch_shapes=[
            pltpu.VMEM((hid_pad, dim), jnp.bfloat16),              # wc1 buffer
            pltpu.VMEM((dim + 2 * hid_pad, hid_pad), jnp.bfloat16),  # TS stack buffer
            pltpu.SemaphoreType.DMA((2,)),
        ],
    )(feat_p, sym_p, p["cdp_stack"], p["gb"], p["wc1"], p["ts_stack"])
    return out[:B, :2]


def bidir_sea_net_forward(x, symbol, fe_params, mlp_params):
    # fix_fe=True: frozen feature extractor in eval mode (no grad), plain JAX.
    feat = lax.stop_gradient(resnet18_features(x, fe_params))
    # Bidirectional SEA MLP: single Pallas TPU kernel.
    return sea_mlp(feat, symbol, mlp_params)


if __name__ == "__main__":
    key = jax.random.PRNGKey(0)
    k_x, k_sym, k_fe, k_mlp = jax.random.split(key, 4)

    B, symbol_size, dim = 4, 16, 512
    x = jax.random.normal(k_x, (B, 3, 32, 32), jnp.float32)           # NCHW images
    symbol = jax.random.uniform(k_sym, (B, symbol_size), jnp.float32)

    fe_params = init_resnet18_params(k_fe)
    mlp_params = init_sea_params(k_mlp, symbol_size, dim)

    out = bidir_sea_net_forward(x, symbol, fe_params, mlp_params)
    out = jax.block_until_ready(out)
    assert out.shape == (B, 2) and out.dtype == jnp.float32
    assert bool(jnp.all(jnp.isfinite(out)))
    print("KERNEL_OK")
</pallas_src>

<mosaic_0001>
module attributes {stable_mosaic.version = 11 : i64} {
  func.func @kernel(%arg0: memref<16x512xbf16, #tpu.memory_space<vmem>>, %arg1: memref<16x128xbf16, #tpu.memory_space<vmem>>, %arg2: memref<256x128xbf16, #tpu.memory_space<vmem>>, %arg3: memref<2x1024xf32, #tpu.memory_space<vmem>>, %arg4: memref<128x512xbf16, #tpu.memory_space<any>>, %arg5: memref<768x128xbf16, #tpu.memory_space<any>>, %arg6: memref<16x128xf32, #tpu.memory_space<vmem>>, %arg7: memref<128x512xbf16, #tpu.memory_space<vmem>>, %arg8: memref<768x128xbf16, #tpu.memory_space<vmem>>, %arg9: memref<2x!tpu.dma_semaphore, #tpu.memory_space<semaphore_mem>>) attributes {dimension_semantics = [], scalar_prefetch = 0 : i64, scratch_operands = 3 : i64, tpu.core_type = #tpu.core_type<tc>} {
    %c0_i32 = arith.constant 0 : i32
    %0 = tpu.memref_slice %arg9[%c0_i32] : memref<2x!tpu.dma_semaphore, #tpu.memory_space<semaphore_mem>> -> memref<1x!tpu.dma_semaphore, #tpu.memory_space<semaphore_mem>>
    %1 = tpu.memref_squeeze %0 : memref<1x!tpu.dma_semaphore, #tpu.memory_space<semaphore_mem>> -> memref<!tpu.dma_semaphore, #tpu.memory_space<semaphore_mem>>
    tpu.enqueue_dma source(%arg4 : memref<128x512xbf16, #tpu.memory_space<any>>) target(%arg7 : memref<128x512xbf16, #tpu.memory_space<vmem>>) target_semaphore(%1 : memref<!tpu.dma_semaphore, #tpu.memory_space<semaphore_mem>>)
    %c1_i32 = arith.constant 1 : i32
    %2 = tpu.memref_slice %arg9[%c1_i32] : memref<2x!tpu.dma_semaphore, #tpu.memory_space<semaphore_mem>> -> memref<1x!tpu.dma_semaphore, #tpu.memory_space<semaphore_mem>>
    %3 = tpu.memref_squeeze %2 : memref<1x!tpu.dma_semaphore, #tpu.memory_space<semaphore_mem>> -> memref<!tpu.dma_semaphore, #tpu.memory_space<semaphore_mem>>
    tpu.enqueue_dma source(%arg5 : memref<768x128xbf16, #tpu.memory_space<any>>) target(%arg8 : memref<768x128xbf16, #tpu.memory_space<vmem>>) target_semaphore(%3 : memref<!tpu.dma_semaphore, #tpu.memory_space<semaphore_mem>>)
    %4 = tpu.iota {dimensions = array<i32: 0>} : vector<16x1xi32>
    %c4_i32 = arith.constant 4 : i32
    %5 = vector.broadcast %c4_i32 : i32 to vector<16x1xi32>
    %6 = arith.cmpi slt, %4, %5 : vector<16x1xi32>
    %7 = arith.extui %6 : vector<16x1xi1> to vector<16x1xi32>
    %8 = arith.sitofp %7 : vector<16x1xi32> to vector<16x1xf32>
    %c0 = arith.constant 0 : index
    %c0_0 = arith.constant 0 : index
    %9 = vector.load %arg1[%c0, %c0_0] : memref<16x128xbf16, #tpu.memory_space<vmem>>, vector<16x128xbf16>
    %c0_1 = arith.constant 0 : index
    %c0_2 = arith.constant 0 : index
    %10 = vector.load %arg2[%c0_1, %c0_2] : memref<256x128xbf16, #tpu.memory_space<vmem>>, vector<128x128xbf16>
    %cst = arith.constant dense<0.000000e+00> : vector<16x128xf32>
    %11 = tpu.matmul %9, %10, %cst {dimension_numbers = #tpu.dot_dimension_numbers<[1], [0], [0], [1], [0, 0, 1, 1], [], []>} : vector<16x128xbf16>, vector<128x128xbf16>, vector<16x128xf32> -> vector<16x128xf32>
    %c0_3 = arith.constant 0 : index
    %c0_4 = arith.constant 0 : index
    %12 = vector.load %arg3[%c0_3, %c0_4] : memref<2x1024xf32, #tpu.memory_space<vmem>>, vector<1x128xf32>
    %c1 = arith.constant 1 : index
    %c0_5 = arith.constant 0 : index
    %13 = vector.load %arg3[%c1, %c0_5] : memref<2x1024xf32, #tpu.memory_space<vmem>>, vector<1x128xf32>
    %14 = vector.broadcast %8 : vector<16x1xf32> to vector<16x128xf32>
    %15 = arith.mulf %11, %14 : vector<16x128xf32>
    %16 = arith.mulf %15, %11 : vector<16x128xf32>
    %17 = tpu.concatenate %15, %16 in 1 : vector<16x128xf32>, vector<16x128xf32> -> vector<16x256xf32>
    %cst_6 = arith.constant dense<0.000000e+00> : vector<256xf32>
    %18 = vector.multi_reduction <add>, %17, %cst_6 [0] : vector<16x256xf32> to vector<256xf32>
    %19 = vector.shape_cast %18 : vector<256xf32> to vector<1x256xf32>
    %cst_7 = arith.constant 2.500000e-01 : f32
    %20 = vector.broadcast %cst_7 : f32 to vector<1x256xf32>
    %21 = arith.mulf %19, %20 : vector<1x256xf32>
    %22 = vector.extract_strided_slice %21 {offsets = [0, 0], sizes = [1, 128], strides = [1, 1]} : vector<1x256xf32> to vector<1x128xf32>
    %23 = vector.extract_strided_slice %21 {offsets = [0, 128], sizes = [1, 128], strides = [1, 1]} : vector<1x256xf32> to vector<1x128xf32>
    %24 = arith.mulf %22, %22 : vector<1x128xf32>
    %25 = arith.subf %23, %24 : vector<1x128xf32>
    %cst_8 = arith.constant 0.000000e+00 : f32
    %26 = vector.broadcast %cst_8 : f32 to vector<1x128xf32>
    %27 = arith.maximumf %25, %26 : vector<1x128xf32>
    %cst_9 = arith.constant 9.99999974E-6 : f32
    %28 = vector.broadcast %cst_9 : f32 to vector<1x128xf32>
    %29 = arith.addf %27, %28 : vector<1x128xf32>
    %30 = math.rsqrt %29 : vector<1x128xf32>
    %31 = arith.mulf %12, %30 : vector<1x128xf32>
    %32 = arith.mulf %22, %31 : vector<1x128xf32>
    %33 = arith.subf %13, %32 : vector<1x128xf32>
    %34 = vector.broadcast %31 : vector<1x128xf32> to vector<16x128xf32>
    %35 = arith.mulf %11, %34 : vector<16x128xf32>
    %36 = vector.broadcast %33 : vector<1x128xf32> to vector<16x128xf32>
    %37 = arith.addf %35, %36 : vector<16x128xf32>
    %38 = arith.negf %37 : vector<16x128xf32>
    %39 = math.exp %38 : vector<16x128xf32>
    %cst_10 = arith.constant 1.000000e+00 : f32
    %40 = vector.broadcast %cst_10 : f32 to vector<16x128xf32>
    %41 = arith.addf %40, %39 : vector<16x128xf32>
    %42 = arith.divf %40, %41 : vector<16x128xf32>
    %c128 = arith.constant 128 : index
    %c0_11 = arith.constant 0 : index
    %43 = vector.load %arg2[%c128, %c0_11] : memref<256x128xbf16, #tpu.memory_space<vmem>>, vector<128x128xbf16>
    %44 = arith.truncf %42 : vector<16x128xf32> to vector<16x128xbf16>
    %cst_12 = arith.constant dense<0.000000e+00> : vector<16x128xf32>
    %45 = tpu.matmul %44, %43, %cst_12 {dimension_numbers = #tpu.dot_dimension_numbers<[1], [0], [0], [1], [0, 0, 1, 1], [], []>} : vector<16x128xbf16>, vector<128x128xbf16>, vector<16x128xf32> -> vector<16x128xf32>
    %c0_13 = arith.constant 0 : index
    %c128_14 = arith.constant 128 : index
    %46 = vector.load %arg3[%c0_13, %c128_14] : memref<2x1024xf32, #tpu.memory_space<vmem>>, vector<1x128xf32>
    %c1_15 = arith.constant 1 : index
    %c128_16 = arith.constant 128 : index
    %47 = vector.load %arg3[%c1_15, %c128_16] : memref<2x1024xf32, #tpu.memory_space<vmem>>, vector<1x128xf32>
    %48 = vector.broadcast %8 : vector<16x1xf32> to vector<16x128xf32>
    %49 = arith.mulf %45, %48 : vector<16x128xf32>
    %50 = arith.mulf %49, %45 : vector<16x128xf32>
    %51 = tpu.concatenate %49, %50 in 1 : vector<16x128xf32>, vector<16x128xf32> -> vector<16x256xf32>
    %cst_17 = arith.constant dense<0.000000e+00> : vector<256xf32>
    %52 = vector.multi_reduction <add>, %51, %cst_17 [0] : vector<16x256xf32> to vector<256xf32>
    %53 = vector.shape_cast %52 : vector<256xf32> to vector<1x256xf32>
    %cst_18 = arith.constant 2.500000e-01 : f32
    %54 = vector.broadcast %cst_18 : f32 to vector<1x256xf32>
    %55 = arith.mulf %53, %54 : vector<1x256xf32>
    %56 = vector.extract_strided_slice %55 {offsets = [0, 0], sizes = [1, 128], strides = [1, 1]} : vector<1x256xf32> to vector<1x128xf32>
    %57 = vector.extract_strided_slice %55 {offsets = [0, 128], sizes = [1, 128], strides = [1, 1]} : vector<1x256xf32> to vector<1x128xf32>
    %58 = arith.mulf %56, %56 : vector<1x128xf32>
    %59 = arith.subf %57, %58 : vector<1x128xf32>
    %cst_19 = arith.constant 0.000000e+00 : f32
    %60 = vector.broadcast %cst_19 : f32 to vector<1x128xf32>
    %61 = arith.maximumf %59, %60 : vector<1x128xf32>
    %cst_20 = arith.constant 9.99999974E-6 : f32
    %62 = vector.broadcast %cst_20 : f32 to vector<1x128xf32>
    %63 = arith.addf %61, %62 : vector<1x128xf32>
    %64 = math.rsqrt %63 : vector<1x128xf32>
    %65 = arith.mulf %46, %64 : vector<1x128xf32>
    %66 = arith.mulf %56, %65 : vector<1x128xf32>
    %67 = arith.subf %47, %66 : vector<1x128xf32>
    %68 = vector.broadcast %65 : vector<1x128xf32> to vector<16x128xf32>
    %69 = arith.mulf %45, %68 : vector<16x128xf32>
    %70 = vector.broadcast %67 : vector<1x128xf32> to vector<16x128xf32>
    %71 = arith.addf %69, %70 : vector<16x128xf32>
    %72 = arith.negf %71 : vector<16x128xf32>
    %73 = math.exp %72 : vector<16x128xf32>
    %cst_21 = arith.constant 1.000000e+00 : f32
    %74 = vector.broadcast %cst_21 : f32 to vector<16x128xf32>
    %75 = arith.addf %74, %73 : vector<16x128xf32>
    %76 = arith.divf %74, %75 : vector<16x128xf32>
    %c0_i32_22 = arith.constant 0 : i32
    %77 = tpu.memref_slice %arg9[%c0_i32_22] : memref<2x!tpu.dma_semaphore, #tpu.memory_space<semaphore_mem>> -> memref<1x!tpu.dma_semaphore, #tpu.memory_space<semaphore_mem>>
    %78 = tpu.memref_squeeze %77 : memref<1x!tpu.dma_semaphore, #tpu.memory_space<semaphore_mem>> -> memref<!tpu.dma_semaphore, #tpu.memory_space<semaphore_mem>>
    tpu.wait_dma2 semaphore(%78 : memref<!tpu.dma_semaphore, #tpu.memory_space<semaphore_mem>>) src(%arg4 : memref<128x512xbf16, #tpu.memory_space<any>>) dst(%arg7 : memref<128x512xbf16, #tpu.memory_space<vmem>>)
    %c0_23 = arith.constant 0 : index
    %c0_24 = arith.constant 0 : index
    %79 = vector.load %arg7[%c0_23, %c0_24] : memref<128x512xbf16, #tpu.memory_space<vmem>>, vector<128x512xbf16>
    %80 = arith.truncf %76 : vector<16x128xf32> to vector<16x128xbf16>
    %cst_25 = arith.constant dense<0.000000e+00> : vector<16x512xf32>
    %81 = tpu.matmul %80, %79, %cst_25 {dimension_numbers = #tpu.dot_dimension_numbers<[1], [0], [0], [1], [0, 0, 1, 1], [], []>} : vector<16x128xbf16>, vector<128x512xbf16>, vector<16x512xf32> -> vector<16x512xf32>
    %c0_26 = arith.constant 0 : index
    %c256 = arith.constant 256 : index
    %82 = vector.load %arg3[%c0_26, %c256] : memref<2x1024xf32, #tpu.memory_space<vmem>>, vector<1x512xf32>
    %c1_27 = arith.constant 1 : index
    %c256_28 = arith.constant 256 : index
    %83 = vector.load %arg3[%c1_27, %c256_28] : memref<2x1024xf32, #tpu.memory_space<vmem>>, vector<1x512xf32>
    %84 = vector.broadcast %8 : vector<16x1xf32> to vector<16x512xf32>
    %85 = arith.mulf %81, %84 : vector<16x512xf32>
    %86 = arith.mulf %85, %81 : vector<16x512xf32>
    %87 = tpu.concatenate %85, %86 in 1 : vector<16x512xf32>, vector<16x512xf32> -> vector<16x1024xf32>
    %cst_29 = arith.constant dense<0.000000e+00> : vector<1024xf32>
    %88 = vector.multi_reduction <add>, %87, %cst_29 [0] : vector<16x1024xf32> to vector<1024xf32>
    %89 = vector.shape_cast %88 : vector<1024xf32> to vector<1x1024xf32>
    %cst_30 = arith.constant 2.500000e-01 : f32
    %90 = vector.broadcast %cst_30 : f32 to vector<1x1024xf32>
    %91 = arith.mulf %89, %90 : vector<1x1024xf32>
    %92 = vector.extract_strided_slice %91 {offsets = [0, 0], sizes = [1, 512], strides = [1, 1]} : vector<1x1024xf32> to vector<1x512xf32>
    %93 = vector.extract_strided_slice %91 {offsets = [0, 512], sizes = [1, 512], strides = [1, 1]} : vector<1x1024xf32> to vector<1x512xf32>
    %94 = arith.mulf %92, %92 : vector<1x512xf32>
    %95 = arith.subf %93, %94 : vector<1x512xf32>
    %cst_31 = arith.constant 0.000000e+00 : f32
    %96 = vector.broadcast %cst_31 : f32 to vector<1x512xf32>
    %97 = arith.maximumf %95, %96 : vector<1x512xf32>
    %cst_32 = arith.constant 9.99999974E-6 : f32
    %98 = vector.broadcast %cst_32 : f32 to vector<1x512xf32>
    %99 = arith.addf %97, %98 : vector<1x512xf32>
    %100 = math.rsqrt %99 : vector<1x512xf32>
    %101 = arith.mulf %82, %100 : vector<1x512xf32>
    %102 = arith.mulf %92, %101 : vector<1x512xf32>
    %103 = arith.subf %83, %102 : vector<1x512xf32>
    %104 = vector.broadcast %101 : vector<1x512xf32> to vector<16x512xf32>
    %105 = arith.mulf %81, %104 : vector<16x512xf32>
    %106 = vector.broadcast %103 : vector<1x512xf32> to vector<16x512xf32>
    %107 = arith.addf %105, %106 : vector<16x512xf32>
    %108 = arith.negf %107 : vector<16x512xf32>
    %109 = math.exp %108 : vector<16x512xf32>
    %cst_33 = arith.constant 1.000000e+00 : f32
    %110 = vector.broadcast %cst_33 : f32 to vector<16x512xf32>
    %111 = arith.addf %110, %109 : vector<16x512xf32>
    %112 = arith.divf %110, %111 : vector<16x512xf32>
    %c0_34 = arith.constant 0 : index
    %c0_35 = arith.constant 0 : index
    %113 = vector.load %arg0[%c0_34, %c0_35] : memref<16x512xbf16, #tpu.memory_space<vmem>>, vector<16x512xbf16>
    %114 = arith.extf %113 : vector<16x512xbf16> to vector<16x512xf32>
    %115 = arith.mulf %114, %112 : vector<16x512xf32>
    %c1_i32_36 = arith.constant 1 : i32
    %116 = tpu.memref_slice %arg9[%c1_i32_36] : memref<2x!tpu.dma_semaphore, #tpu.memory_space<semaphore_mem>> -> memref<1x!tpu.dma_semaphore, #tpu.memory_space<semaphore_mem>>
    %117 = tpu.memref_squeeze %116 : memref<1x!tpu.dma_semaphore, #tpu.memory_space<semaphore_mem>> -> memref<!tpu.dma_semaphore, #tpu.memory_space<semaphore_mem>>
    tpu.wait_dma2 semaphore(%117 : memref<!tpu.dma_semaphore, #tpu.memory_space<semaphore_mem>>) src(%arg5 : memref<768x128xbf16, #tpu.memory_space<any>>) dst(%arg8 : memref<768x128xbf16, #tpu.memory_space<vmem>>)
    %c0_37 = arith.constant 0 : index
    %c0_38 = arith.constant 0 : index
    %118 = vector.load %arg8[%c0_37, %c0_38] : memref<768x128xbf16, #tpu.memory_space<vmem>>, vector<512x128xbf16>
    %119 = arith.truncf %115 : vector<16x512xf32> to vector<16x512xbf16>
    %cst_39 = arith.constant dense<0.000000e+00> : vector<16x128xf32>
    %120 = tpu.matmul %119, %118, %cst_39 {dimension_numbers = #tpu.dot_dimension_numbers<[1], [0], [0], [1], [0, 0, 1, 1], [], []>} : vector<16x512xbf16>, vector<512x128xbf16>, vector<16x128xf32> -> vector<16x128xf32>
    %c0_40 = arith.constant 0 : index
    %c768 = arith.constant 768 : index
    %121 = vector.load %arg3[%c0_40, %c768] : memref<2x1024xf32, #tpu.memory_space<vmem>>, vector<1x128xf32>
    %c1_41 = arith.constant 1 : index
    %c768_42 = arith.constant 768 : index
    %122 = vector.load %arg3[%c1_41, %c768_42] : memref<2x1024xf32, #tpu.memory_space<vmem>>, vector<1x128xf32>
    %123 = vector.broadcast %8 : vector<16x1xf32> to vector<16x128xf32>
    %124 = arith.mulf %120, %123 : vector<16x128xf32>
    %125 = arith.mulf %124, %120 : vector<16x128xf32>
    %126 = tpu.concatenate %124, %125 in 1 : vector<16x128xf32>, vector<16x128xf32> -> vector<16x256xf32>
    %cst_43 = arith.constant dense<0.000000e+00> : vector<256xf32>
    %127 = vector.multi_reduction <add>, %126, %cst_43 [0] : vector<16x256xf32> to vector<256xf32>
    %128 = vector.shape_cast %127 : vector<256xf32> to vector<1x256xf32>
    %cst_44 = arith.constant 2.500000e-01 : f32
    %129 = vector.broadcast %cst_44 : f32 to vector<1x256xf32>
    %130 = arith.mulf %128, %129 : vector<1x256xf32>
    %131 = vector.extract_strided_slice %130 {offsets = [0, 0], sizes = [1, 128], strides = [1, 1]} : vector<1x256xf32> to vector<1x128xf32>
    %132 = vector.extract_strided_slice %130 {offsets = [0, 128], sizes = [1, 128], strides = [1, 1]} : vector<1x256xf32> to vector<1x128xf32>
    %133 = arith.mulf %131, %131 : vector<1x128xf32>
    %134 = arith.subf %132, %133 : vector<1x128xf32>
    %cst_45 = arith.constant 0.000000e+00 : f32
    %135 = vector.broadcast %cst_45 : f32 to vector<1x128xf32>
    %136 = arith.maximumf %134, %135 : vector<1x128xf32>
    %cst_46 = arith.constant 9.99999974E-6 : f32
    %137 = vector.broadcast %cst_46 : f32 to vector<1x128xf32>
    %138 = arith.addf %136, %137 : vector<1x128xf32>
    %139 = math.rsqrt %138 : vector<1x128xf32>
    %140 = arith.mulf %121, %139 : vector<1x128xf32>
    %141 = arith.mulf %131, %140 : vector<1x128xf32>
    %142 = arith.subf %122, %141 : vector<1x128xf32>
    %143 = vector.broadcast %140 : vector<1x128xf32> to vector<16x128xf32>
    %144 = arith.mulf %120, %143 : vector<16x128xf32>
    %145 = vector.broadcast %142 : vector<1x128xf32> to vector<16x128xf32>
    %146 = arith.addf %144, %145 : vector<16x128xf32>
    %cst_47 = arith.constant 0.000000e+00 : f32
    %147 = vector.broadcast %cst_47 : f32 to vector<16x128xf32>
    %148 = arith.maximumf %146, %147 : vector<16x128xf32>
    %149 = arith.mulf %148, %76 : vector<16x128xf32>
    %c512 = arith.constant 512 : index
    %c0_48 = arith.constant 0 : index
    %150 = vector.load %arg8[%c512, %c0_48] : memref<768x128xbf16, #tpu.memory_space<vmem>>, vector<128x128xbf16>
    %151 = arith.truncf %149 : vector<16x128xf32> to vector<16x128xbf16>
    %cst_49 = arith.constant dense<0.000000e+00> : vector<16x128xf32>
    %152 = tpu.matmul %151, %150, %cst_49 {dimension_numbers = #tpu.dot_dimension_numbers<[1], [0], [0], [1], [0, 0, 1, 1], [], []>} : vector<16x128xbf16>, vector<128x128xbf16>, vector<16x128xf32> -> vector<16x128xf32>
    %c0_50 = arith.constant 0 : index
    %c896 = arith.constant 896 : index
    %153 = vector.load %arg3[%c0_50, %c896] : memref<2x1024xf32, #tpu.memory_space<vmem>>, vector<1x128xf32>
    %c1_51 = arith.constant 1 : index
    %c896_52 = arith.constant 896 : index
    %154 = vector.load %arg3[%c1_51, %c896_52] : memref<2x1024xf32, #tpu.memory_space<vmem>>, vector<1x128xf32>
    %155 = vector.broadcast %8 : vector<16x1xf32> to vector<16x128xf32>
    %156 = arith.mulf %152, %155 : vector<16x128xf32>
    %157 = arith.mulf %156, %152 : vector<16x128xf32>
    %158 = tpu.concatenate %156, %157 in 1 : vector<16x128xf32>, vector<16x128xf32> -> vector<16x256xf32>
    %cst_53 = arith.constant dense<0.000000e+00> : vector<256xf32>
    %159 = vector.multi_reduction <add>, %158, %cst_53 [0] : vector<16x256xf32> to vector<256xf32>
    %160 = vector.shape_cast %159 : vector<256xf32> to vector<1x256xf32>
    %cst_54 = arith.constant 2.500000e-01 : f32
    %161 = vector.broadcast %cst_54 : f32 to vector<1x256xf32>
    %162 = arith.mulf %160, %161 : vector<1x256xf32>
    %163 = vector.extract_strided_slice %162 {offsets = [0, 0], sizes = [1, 128], strides = [1, 1]} : vector<1x256xf32> to vector<1x128xf32>
    %164 = vector.extract_strided_slice %162 {offsets = [0, 128], sizes = [1, 128], strides = [1, 1]} : vector<1x256xf32> to vector<1x128xf32>
    %165 = arith.mulf %163, %163 : vector<1x128xf32>
    %166 = arith.subf %164, %165 : vector<1x128xf32>
    %cst_55 = arith.constant 0.000000e+00 : f32
    %167 = vector.broadcast %cst_55 : f32 to vector<1x128xf32>
    %168 = arith.maximumf %166, %167 : vector<1x128xf32>
    %cst_56 = arith.constant 9.99999974E-6 : f32
    %169 = vector.broadcast %cst_56 : f32 to vector<1x128xf32>
    %170 = arith.addf %168, %169 : vector<1x128xf32>
    %171 = math.rsqrt %170 : vector<1x128xf32>
    %172 = arith.mulf %153, %171 : vector<1x128xf32>
    %173 = arith.mulf %163, %172 : vector<1x128xf32>
    %174 = arith.subf %154, %173 : vector<1x128xf32>
    %175 = vector.broadcast %172 : vector<1x128xf32> to vector<16x128xf32>
    %176 = arith.mulf %152, %175 : vector<16x128xf32>
    %177 = vector.broadcast %174 : vector<1x128xf32> to vector<16x128xf32>
    %178 = arith.addf %176, %177 : vector<16x128xf32>
    %cst_57 = arith.constant 0.000000e+00 : f32
    %179 = vector.broadcast %cst_57 : f32 to vector<16x128xf32>
    %180 = arith.maximumf %178, %179 : vector<16x128xf32>
    %181 = arith.mulf %180, %42 : vector<16x128xf32>
    %c640 = arith.constant 640 : index
    %c0_58 = arith.constant 0 : index
    %182 = vector.load %arg8[%c640, %c0_58] : memref<768x128xbf16, #tpu.memory_space<vmem>>, vector<128x128xbf16>
    %183 = arith.truncf %181 : vector<16x128xf32> to vector<16x128xbf16>
    %cst_59 = arith.constant dense<0.000000e+00> : vector<16x128xf32>
    %184 = tpu.matmul %183, %182, %cst_59 {dimension_numbers = #tpu.dot_dimension_numbers<[1], [0], [0], [1], [0, 0, 1, 1], [], []>} : vector<16x128xbf16>, vector<128x128xbf16>, vector<16x128xf32> -> vector<16x128xf32>
    %c0_60 = arith.constant 0 : index
    %c0_61 = arith.constant 0 : index
    %185 = vector.load %arg6[%c0_60, %c0_61] : memref<16x128xf32, #tpu.memory_space<vmem>>, vector<16x128xf32>
    tpu.vector_store %arg6[%c0_60, %c0_61], %184 {strides = array<i32>} : memref<16x128xf32, #tpu.memory_space<vmem>>, vector<16x128xf32>,
    return
  }
}

</mosaic_0001>

<llo_original>
// kernel: tpu_custom_call.1
$region0: #{tpu_custom_call.1}
  #allocation0 [shape = 'u32[]', space=smem, size = 0x4, offset = 0x4, fixed_abs, tag = 'smem constant byte address 0x4 - core index']
  #allocation1 [shape = 'u32[144,128]{1,0:T(1,128)}', space=vmem, size = 0x12000, scoped, tag = 'internal scratch']
  #allocation2 [shape = 'bf16[128,512]{1,0:T(16,128)(2,1)}', space=vmem, size = 0x20000, scoped, tag = 'scratch operand']
  #allocation3 [shape = 'bf16[768,128]{1,0:T(16,128)(2,1)}', space=vmem, size = 0x30000, scoped, tag = 'scratch operand']
  #allocation4 [shape = 's32[2]{0}', space=sflag, size = 0x8, scoped, tag = 'scratch operand']
  #allocation14 [shape = 's32[]', space=sflag, size = 0x4, offset = 0, fixed_abs, tag = 'sflag constant byte address 0x0 - dummy sync flag']
  #allocation16 [shape = 's32[]', space=sflag, size = 0x4, offset = 0, fixed_abs, tag = 'sflag constant byte address 0x0 - dummy sync flag']
  #allocation17 [shape = 's32[]', space=sflag, size = 0x4, offset = 0, fixed_abs, tag = 'sflag constant byte address 0x0 - dummy sync flag']
  #allocation18 [shape = 'u32[]', space=smem, size = 0x4, offset = 0x44, fixed_abs, tag = 'smem constant byte address 0x44 - assertion arg 0']
  #allocation19 [shape = 'u32[]', space=smem, size = 0x4, offset = 0x48, fixed_abs, tag = 'smem constant byte address 0x48 - assertion arg 1']
  %s0 = inlined_call_operand.hbm [shape: bf16[16,512], index: 0, kind: input, shape index: {}]
  %s1 = inlined_call_operand.hbm [shape: bf16[16,128], index: 1, kind: input, shape index: {}]
  %s2 = inlined_call_operand.hbm [shape: bf16[256,128], index: 2, kind: input, shape index: {}]
  %s3 = inlined_call_operand.hbm [shape: f32[2,1024], index: 3, kind: input, shape index: {}]
  %s4 = inlined_call_operand.hbm [shape: bf16[128,512], index: 4, kind: input, shape index: {}]
  %s5 = inlined_call_operand.hbm [shape: bf16[768,128], index: 5, kind: input, shape index: {}]
  %s6 = inlined_call_operand.hbm [shape: f32[16,128], index: 6, kind: output, shape index: {}]
  %s7 = sld [smem:[#allocation0]]
  $region46: #{tpu_custom_call.1} parent=0
    _
  %s9 = ssub.s32 1, %s7
  %s10 = scalar_select 0, %s9, %s7
  $region1: #{tpu_custom_call.1} parent=0
    #allocation5 [shape = 'u8[16384]{0}', space=vmem, size = 0x4000, scoped, tag = 'input window, operand 0, single buffered']
    #allocation6 [shape = 's32[1]{0}', space=sflag, size = 0x4, scoped, tag = 'scoped memory for tpu_custom_call.1']
    #allocation7 [shape = 's32[1]{0}', space=sflag, size = 0x4, scoped, tag = 'scoped memory for tpu_custom_call.1']
    #allocation8 [shape = 'u8[4096]{0}', space=vmem, size = 0x1000, scoped, tag = 'input window, operand 1, single buffered']
    #allocation9 [shape = 's32[1]{0}', space=sflag, size = 0x4, scoped, tag = 'scoped memory for tpu_custom_call.1']
    #allocation10 [shape = 'u8[65536]{0}', space=vmem, size = 0x10000, scoped, tag = 'input window, operand 2, single buffered']
    #allocation11 [shape = 'u8[8192]{0}', space=vmem, size = 0x2000, scoped, tag = 'input window, operand 3, single buffered']
    #allocation12 [shape = 's32[1]{0}', space=sflag, size = 0x4, scoped, tag = 'scoped memory for tpu_custom_call.1']
    #allocation13 [shape = 'u8[8192]{0}', space=vmem, size = 0x2000, scoped, tag = 'output window, operand 0, single buffered']
    #allocation15 [shape = 'u32[9]{0}', space=smem, size = 0x24, scoped, tag = 'DMA stride descriptor']
    %11 = vsyncpa [#allocation6], 0
    %12 = vsyncpa [#allocation9], 0
    %13 = vsyncpa [#allocation12], 0
    %14 = vsyncpa [#allocation7], 0
    // Predicated region
    $region2: #{tpu_custom_call.1} parent=1 // pred_check
      _
    $region3: #{tpu_custom_call.1} parent=1 // pred_check_branch
      %16 = sbr.rel (0) target = $region5
    $region4: #{tpu_custom_call.1} parent=1 // pred_region
      %s18 = ssub.s32 512, 512
      %19 = vsyncadd [#allocation6], %s18
      %s20 = sshll.u32 [#allocation5], 4
      %s21 = int_to_ptr.vmem [resolvable:$true] %s20
      %26 = dma.hbm_to_vmem [thread:$0]  %s0, 512, %s21, [#allocation6], 256, 256, 16
    $region5: #{tpu_custom_call.1} parent=1 // pred_fallthru
      _
    // Predicated region
    $region6: #{tpu_custom_call.1} parent=1 // pred_check
      _
    $region7: #{tpu_custom_call.1} parent=1 // pred_check_branch
      %28 = sbr.rel (0) target = $region9
    $region8: #{tpu_custom_call.1} parent=1 // pred_region
      %s30 = ssub.s32 128, 128
      %31 = vsyncadd [#allocation9], %s30
      %s32 = sshll.u32 [#allocation8], 4
      %s33 = int_to_ptr.vmem [resolvable:$true] %s32
      %38 = dma.hbm_to_vmem [thread:$0]  %s1, 128, %s33, [#allocation9], 64, 64, 4
    $region9: #{tpu_custom_call.1} parent=1 // pred_fallthru
      _
    // Predicated region
    $region10: #{tpu_custom_call.1} parent=1 // pred_check
      _
    $region11: #{tpu_custom_call.1} parent=1 // pred_check_branch
      %40 = sbr.rel (0) target = $region13
    $region12: #{tpu_custom_call.1} parent=1 // pred_region
      %s42 = ssub.s32 2048, 2048
      %43 = vsyncadd [#allocation9], %s42
      %s44 = sshll.u32 [#allocation10], 4
      %s45 = int_to_ptr.vmem [resolvable:$true] %s44
      %50 = dma.hbm_to_vmem [thread:$0]  %s2, 2048, %s45, [#allocation9], 64, 64, 4
    $region13: #{tpu_custom_call.1} parent=1 // pred_fallthru
      _
    // Predicated region
    $region14: #{tpu_custom_call.1} parent=1 // pred_check
      _
    $region15: #{tpu_custom_call.1} parent=1 // pred_check_branch
      %52 = sbr.rel (0) target = $region17
    $region16: #{tpu_custom_call.1} parent=1 // pred_region
      %s54 = ssub.s32 256, 256
      %55 = vsyncadd [#allocation12], %s54
      %s57 = sshll.u32 [#allocation11], 4
      %s58 = int_to_ptr.vmem [resolvable:$true] %s57
      %60 = dma.hbm_to_vmem [thread:$0]  %s3, 256, %s58, [#allocation12]
    $region17: #{tpu_custom_call.1} parent=1 // pred_fallthru
      _
    // Predicated region
    $region18: #{tpu_custom_call.1} parent=1 // pred_check
      _
    $region19: #{tpu_custom_call.1} parent=1 // pred_check_branch
      %62 = sbr.rel (0) target = $region21
    $region20: #{tpu_custom_call.1} parent=1 // pred_region
      %63 = dma.done [#allocation6], 512
    $region21: #{tpu_custom_call.1} parent=1 // pred_fallthru
      _
    // Predicated region
    $region22: #{tpu_custom_call.1} parent=1 // pred_check
      _
    $region23: #{tpu_custom_call.1} parent=1 // pred_check_branch
      %65 = sbr.rel (0) target = $region25
    $region24: #{tpu_custom_call.1} parent=1 // pred_region
      %66 = dma.done [#allocation9], 128
    $region25: #{tpu_custom_call.1} parent=1 // pred_fallthru
      _
    // Predicated region
    $region26: #{tpu_custom_call.1} parent=1 // pred_check
      _
    $region27: #{tpu_custom_call.1} parent=1 // pred_check_branch
      %68 = sbr.rel (0) target = $region29
    $region28: #{tpu_custom_call.1} parent=1 // pred_region
      %69 = dma.done [#allocation9], 2048
    $region29: #{tpu_custom_call.1} parent=1 // pred_fallthru
      _
    // Predicated region
    $region30: #{tpu_custom_call.1} parent=1 // pred_check
      _
    $region31: #{tpu_custom_call.1} parent=1 // pred_check_branch
      %71 = sbr.rel (0) target = $region33
    $region32: #{tpu_custom_call.1} parent=1 // pred_region
      %72 = dma.done [#allocation12], 256
    $region33: #{tpu_custom_call.1} parent=1 // pred_fallthru
      _
    %s75 = sshll.u32 1, 14
    %s76 = sxor.u32 4294967295, %s75
    %s78 = sld [smem:[#allocation0]]
    %s79 = sadd.s32 2, %s78
    %s81 = sshll.u32 7, 26
    %s82 = sxor.u32 4294967295, %s81
    %s83 = sand.u32 0, %s82
    %s84 = sshll.u32 %s79, 26
    %s85 = sor.u32 %s83, %s84
    %s86 = sshll.u32 [#allocation2], 4
    %s87 = int_to_ptr.vmem [resolvable:$true] %s86
    %90 = sst [smem:[#allocation15]] 512
    %s91 = scalar_lea.smem [#allocation15], 1
    %92 = sst [smem:[%s91]] 512
    %s93 = scalar_lea.smem [#allocation15], 2
    %94 = sst [smem:[%s93]] 4
    %s95 = scalar_lea.smem [#allocation15], 3
    %96 = sst [smem:[%s95]] 64
    %s97 = scalar_lea.smem [#allocation15], 4
    %98 = sst [smem:[%s97]] 128
    %s99 = scalar_lea.smem [#allocation15], 5
    %100 = sst [smem:[%s99]] 2
    %s101 = scalar_lea.smem [#allocation15], 6
    %102 = sst [smem:[%s101]] 256
    %s103 = scalar_lea.smem [#allocation15], 7
    %104 = sst [smem:[%s103]] 64
    %s105 = scalar_lea.smem [#allocation15], 8
    %106 = sst [smem:[%s105]] 4
    %108 = dma.general %s4, 4096, %s87, [#allocation4], [#allocation14], [#allocation15], %s85, 0
    %s109 = scalar_lea.sflag [#allocation4], 1
    // Predicated region
    $region34: #{tpu_custom_call.1} parent=1 // pred_check
      _
    $region35: #{tpu_custom_call.1} parent=1 // pred_check_branch
      %111 = sbr.rel target = $region37
    $region36: #{tpu_custom_call.1} parent=1 // pred_region
      %112 = sst [smem:[#allocation18]] [#allocation17]
      %113 = sst [smem:[#allocation19]] [#allocation16]
    $region37: #{tpu_custom_call.1} parent=1 // pred_fallthru
      _
    %115 = shalt.err (0)
    %s117 = sshll.u32 [#allocation3], 4
    %s118 = int_to_ptr.vmem [resolvable:$true] %s117
    %120 = dma.hbm_to_vmem [thread:$0]  %s5, 6144, %s118, %s109
    %v121 = vlaneseq
    %v122 = vshrl.u32 %v121, 7
    %v123 = vadd.s32 %v122, 8
    %vm124 = vcmp.lt.s32.totalorder %v122, 4
    %vm125 = vcmp.lt.s32.totalorder %v123, 4
    %v126 = vsel %vm124, 1, 0
    %v127 = vsel %vm125, 1, 0
    %v128 = vcvt.s32.f32 %v126
    %v129 = vcvt.s32.f32 %v127
    %v130 = vld [vmem:[#allocation8] sm:$0xf]
    %v131 = vld [vmem:[#allocation8 + $0x4] sm:$0xf]
    %v132 = vld [vmem:[#allocation10] sm:$0xf]
    %v133 = vld [vmem:[#allocation10 + $0x4] sm:$0xf]
    %v134 = vld [vmem:[#allocation10 + $0x8] sm:$0xf]
    %v135 = vld [vmem:[#allocation10 + $0xc] sm:$0xf]
    %v136 = vld [vmem:[#allocation10 + $0x10] sm:$0xf]
    %v137 = vld [vmem:[#allocation10 + $0x14] sm:$0xf]
    %v138 = vld [vmem:[#allocation10 + $0x18] sm:$0xf]
    %v139 = vld [vmem:[#allocation10 + $0x1c] sm:$0xf]
    %v140 = vld [vmem:[#allocation10 + $0x20] sm:$0xf]
    %v141 = vld [vmem:[#allocation10 + $0x24] sm:$0xf]
    %v142 = vld [vmem:[#allocation10 + $0x28] sm:$0xf]
    %v143 = vld [vmem:[#allocation10 + $0x2c] sm:$0xf]
    %v144 = vld [vmem:[#allocation10 + $0x30] sm:$0xf]
    %v145 = vld [vmem:[#allocation10 + $0x34] sm:$0xf]
    %v146 = vld [vmem:[#allocation10 + $0x38] sm:$0xf]
    %v147 = vld [vmem:[#allocation10 + $0x3c] sm:$0xf]
    %v150 = vunpack.c.l.b16 %v130
    %v151 = vunpack.c.l.b16 %v131
    %v152 = vpack.c.b16 %v151, %v150
    %v170 = vunpack.c.l.b16 %v132
    %v171 = vunpack.c.l.b16 %v133
    %v172 = vunpack.c.l.b16 %v134
    %v173 = vunpack.c.l.b16 %v135
    %v174 = vunpack.c.l.b16 %v136
    %v175 = vunpack.c.l.b16 %v137
    %v176 = vunpack.c.l.b16 %v138
    %v177 = vunpack.c.l.b16 %v139
    %v178 = vunpack.c.l.b16 %v140
    %v179 = vunpack.c.l.b16 %v141
    %v180 = vunpack.c.l.b16 %v142
    %v181 = vunpack.c.l.b16 %v143
    %v182 = vunpack.c.l.b16 %v144
    %v183 = vunpack.c.l.b16 %v145
    %v184 = vunpack.c.l.b16 %v146
    %v185 = vunpack.c.l.b16 %v147
    %v186 = vpack.c.b16 %v171, %v170
    %v187 = vpack.c.b16 %v173, %v172
    %v188 = vpack.c.b16 %v175, %v174
    %v189 = vpack.c.b16 %v177, %v176
    %v190 = vpack.c.b16 %v179, %v178
    %v191 = vpack.c.b16 %v181, %v180
    %v192 = vpack.c.b16 %v183, %v182
    %v193 = vpack.c.b16 %v185, %v184
    %202 = vmatprep.subr.bf16.mxu0 0
    %203 = vmatpush1.bf16.msra.mxu0 %v186
    %204 = vmatprep.subr.bf16.mxu0 0
    %205 = vmatpush1.bf16.msra.mxu0 %v187
    %206 = vmatprep.subr.bf16.mxu0 0
    %207 = vmatpush1.bf16.msra.mxu0 %v188
    %208 = vmatprep.subr.bf16.mxu0 0
    %209 = vmatpush1.bf16.msra.mxu0 %v189
    %210 = vmatprep.subr.bf16.mxu0 0
    %211 = vmatpush1.bf16.msra.mxu0 %v190
    %212 = vmatprep.subr.bf16.mxu0 0
    %213 = vmatpush1.bf16.msra.mxu0 %v191
    %214 = vmatprep.subr.bf16.mxu0 0
    %215 = vmatpush1.bf16.msra.mxu0 %v192
    %216 = vmatprep.subr.bf16.mxu0 0
    %217 = vmatpush1.bf16.msra.mxu0 %v193
    %218 = vmatprep.subr.bf16.mxu0 0
    %219 = vmatpush1.bf16.msra.mxu0 0
    %220 = vmatprep.subr.bf16.mxu0 0
    %221 = vmatpush1.bf16.msra.mxu0 0
    %222 = vmatprep.subr.bf16.mxu0 0
    %223 = vmatpush1.bf16.msra.mxu0 0
    %224 = vmatprep.subr.bf16.mxu0 0
    %225 = vmatpush1.bf16.msra.mxu0 0
    %226 = vmatprep.subr.bf16.mxu0 0
    %227 = vmatpush1.bf16.msra.mxu0 0
    %228 = vmatprep.subr.bf16.mxu0 0
    %229 = vmatpush1.bf16.msra.mxu0 0
    %230 = vmatprep.subr.bf16.mxu0 0
    %231 = vmatpush1.bf16.msra.mxu0 0
    %232 = vmatprep.subr.bf16.mxu0 0
    %233 = vmatpush1.bf16.msra.mxu0 0
    %234 = vmatprep.mubr.bf16.mxu0 0
    %235 = vmatmul.mubr.bf16.gmra.mrb[0].mxu0 %v152
    %v236 = vpop.f32.mrb[0].mxu0
    %v237 = vadd.f32 0.0, %v236
    %v238 = vpop.f32.mrb[0].mxu0
    %v239 = vpop.f32.mrb[0].mxu0
    %v240 = vadd.f32 0.0, %v239
    %v241 = vpop.f32.mrb[0].mxu0
    %242 = vdwg.mxu0
    %v243 = vld [vmem:[#allocation11] sm:$0x1]
    %v244 = vld [vmem:[#allocation11 + $0x1] sm:$0x1]
    %v245 = vmul.f32 %v237, %v128
    %v246 = vmul.f32 %v240, %v129
    %v247 = vmul.f32 %v245, %v237
    %v248 = vmul.f32 %v246, %v240
    %v249 = vadd.f32 %v245, %v246
    %v250 = vrot.slane %v249, 4
    %v251 = vadd.f32 %v249, %v250
    %v252 = vrot.slane %v251, 2
    %v253 = vadd.f32 %v251, %v252
    %v254 = vrot.slane %v253, 1
    %v255 = vadd.f32 %v253, %v254
    %v256 = vadd.f32 %v247, %v248
    %v257 = vrot.slane %v256, 4
    %v258 = vadd.f32 %v256, %v257
    %v259 = vrot.slane %v258, 2
    %v260 = vadd.f32 %v258, %v259
    %v261 = vrot.slane %v260, 1
    %v262 = vadd.f32 %v260, %v261
    %v263 = vmul.f32 %v255, 0.25
    %v264 = vmul.f32 %v262, 0.25
    %v265 = vmul.f32 %v263, %v263
    %v266 = vsub.f32 %v264, %v265
    %v267 = vmax.f32 %v266, 0.0
    %v268 = vadd.f32 %v267, 1e-05
    %v269 = vrsqrt.pop %v268
    %v270 = vmul.f32 %v243, %v269
    %v271 = vmul.f32 %v263, %v270
    %v272 = vsub.f32 %v244, %v271
    %v273 = vlaneseq
    %v274 = vshrl.u32 %v273, 7
    %v275 = vsub.s32 0, %v274
    %v276 = vrot.slane %v270, %v275
    %v277 = vmul.f32 %v237, %v276
    %v278 = vmul.f32 %v240, %v276
    %v279 = vlaneseq
    %v280 = vshrl.u32 %v279, 7
    %v281 = vsub.s32 0, %v280
    %v282 = vrot.slane %v272, %v281
    %v283 = vadd.f32 %v277, %v282
    %v284 = vadd.f32 %v278, %v282
    %v285 = vxor.u32 %v283, 2147483648
    %v286 = vxor.u32 %v284, 2147483648
    %v287 = vmul.f32 %v285, 1.442695
    %v288 = vpow.pop %v287
    %v289 = vmul.f32 %v286, 1.442695
    %v290 = vpow.pop %v289
    %v291 = vadd.f32 %v288, 1.0
    %v292 = vadd.f32 %v290, 1.0
    %v293 = vrcp.pop %v291
    %v294 = vmul.f32 1.0, %v293
    %v295 = vrcp.pop %v292
    %v296 = vmul.f32 1.0, %v295
    %v297 = vld [vmem:[#allocation10 + $0x40] sm:$0xf]
    %v298 = vld [vmem:[#allocation10 + $0x44] sm:$0xf]
    %v299 = vld [vmem:[#allocation10 + $0x48] sm:$0xf]
    %v300 = vld [vmem:[#allocation10 + $0x4c] sm:$0xf]
    %v301 = vld [vmem:[#allocation10 + $0x50] sm:$0xf]
    %v302 = vld [vmem:[#allocation10 + $0x54] sm:$0xf]
    %v303 = vld [vmem:[#allocation10 + $0x58] sm:$0xf]
    %v304 = vld [vmem:[#allocation10 + $0x5c] sm:$0xf]
    %v305 = vld [vmem:[#allocation10 + $0x60] sm:$0xf]
    %v306 = vld [vmem:[#allocation10 + $0x64] sm:$0xf]
    %v307 = vld [vmem:[#allocation10 + $0x68] sm:$0xf]
    %v308 = vld [vmem:[#allocation10 + $0x6c] sm:$0xf]
    %v309 = vld [vmem:[#allocation10 + $0x70] sm:$0xf]
    %v310 = vld [vmem:[#allocation10 + $0x74] sm:$0xf]
    %v311 = vld [vmem:[#allocation10 + $0x78] sm:$0xf]
    %v312 = vld [vmem:[#allocation10 + $0x7c] sm:$0xf]
    %v313 = vpack.c.bf16 %v296, %v294
    %v330 = vunpack.c.l.b16 %v297
    %v331 = vunpack.c.l.b16 %v298
    %v332 = vunpack.c.l.b16 %v299
    %v333 = vunpack.c.l.b16 %v300
    %v334 = vunpack.c.l.b16 %v301
    %v335 = vunpack.c.l.b16 %v302
    %v336 = vunpack.c.l.b16 %v303
    %v337 = vunpack.c.l.b16 %v304
    %v338 = vunpack.c.l.b16 %v305
    %v339 = vunpack.c.l.b16 %v306
    %v340 = vunpack.c.l.b16 %v307
    %v341 = vunpack.c.l.b16 %v308
    %v342 = vunpack.c.l.b16 %v309
    %v343 = vunpack.c.l.b16 %v310
    %v344 = vunpack.c.l.b16 %v311
    %v345 = vunpack.c.l.b16 %v312
    %v346 = vpack.c.b16 %v331, %v330
    %v347 = vpack.c.b16 %v333, %v332
    %v348 = vpack.c.b16 %v335, %v334
    %v349 = vpack.c.b16 %v337, %v336
    %v350 = vpack.c.b16 %v339, %v338
    %v351 = vpack.c.b16 %v341, %v340
    %v352 = vpack.c.b16 %v343, %v342
    %v353 = vpack.c.b16 %v345, %v344
    %362 = vmatprep.subr.bf16.mxu0 0
    %363 = vmatpush1.bf16.msra.mxu0 %v346
    %364 = vmatprep.subr.bf16.mxu0 0
    %365 = vmatpush1.bf16.msra.mxu0 %v347
    %366 = vmatprep.subr.bf16.mxu0 0
    %367 = vmatpush1.bf16.msra.mxu0 %v348
    %368 = vmatprep.subr.bf16.mxu0 0
    %369 = vmatpush1.bf16.msra.mxu0 %v349
    %370 = vmatprep.subr.bf16.mxu0 0
    %371 = vmatpush1.bf16.msra.mxu0 %v350
    %372 = vmatprep.subr.bf16.mxu0 0
    %373 = vmatpush1.bf16.msra.mxu0 %v351
    %374 = vmatprep.subr.bf16.mxu0 0
    %375 = vmatpush1.bf16.msra.mxu0 %v352
    %376 = vmatprep.subr.bf16.mxu0 0
    %377 = vmatpush1.bf16.msra.mxu0 %v353
    %378 = vmatprep.subr.bf16.mxu0 0
    %379 = vmatpush1.bf16.msra.mxu0 0
    %380 = vmatprep.subr.bf16.mxu0 0
    %381 = vmatpush1.bf16.msra.mxu0 0
    %382 = vmatprep.subr.bf16.mxu0 0
    %383 = vmatpush1.bf16.msra.mxu0 0
    %384 = vmatprep.subr.bf16.mxu0 0
    %385 = vmatpush1.bf16.msra.mxu0 0
    %386 = vmatprep.subr.bf16.mxu0 0
    %387 = vmatpush1.bf16.msra.mxu0 0
    %388 = vmatprep.subr.bf16.mxu0 0
    %389 = vmatpush1.bf16.msra.mxu0 0
    %390 = vmatprep.subr.bf16.mxu0 0
    %391 = vmatpush1.bf16.msra.mxu0 0
    %392 = vmatprep.subr.bf16.mxu0 0
    %393 = vmatpush1.bf16.msra.mxu0 0
    %394 = vmatprep.mubr.bf16.mxu0 0
    %395 = vmatmul.mubr.bf16.gmra.mrb[0].mxu0 %v313
    %v396 = vpop.f32.mrb[0].mxu0
    %v397 = vadd.f32 0.0, %v396
    %v398 = vpop.f32.mrb[0].mxu0
    %v399 = vpop.f32.mrb[0].mxu0
    %v400 = vadd.f32 0.0, %v399
    %v401 = vpop.f32.mrb[0].mxu0
    %402 = vdwg.mxu0
    %v403 = vld [vmem:[#allocation11 + $0x2] sm:$0x1]
    %v404 = vld [vmem:[#allocation11 + $0x3] sm:$0x1]
    %v405 = vmul.f32 %v397, %v128
    %v406 = vmul.f32 %v400, %v129
    %v407 = vmul.f32 %v405, %v397
    %v408 = vmul.f32 %v406, %v400
    %v409 = vadd.f32 %v405, %v406
    %v410 = vrot.slane %v409, 4
    %v411 = vadd.f32 %v409, %v410
    %v412 = vrot.slane %v411, 2
    %v413 = vadd.f32 %v411, %v412
    %v414 = vrot.slane %v413, 1
    %v415 = vadd.f32 %v413, %v414
    %v416 = vadd.f32 %v407, %v408
    %v417 = vrot.slane %v416, 4
    %v418 = vadd.f32 %v416, %v417
    %v419 = vrot.slane %v418, 2
    %v420 = vadd.f32 %v418, %v419
    %v421 = vrot.slane %v420, 1
    %v422 = vadd.f32 %v420, %v421
    %v423 = vmul.f32 %v415, 0.25
    %v424 = vmul.f32 %v422, 0.25
    %v425 = vmul.f32 %v423, %v423
    %v426 = vsub.f32 %v424, %v425
    %v427 = vmax.f32 %v426, 0.0
    %v428 = vadd.f32 %v427, 1e-05
    %v429 = vrsqrt.pop %v428
    %v430 = vmul.f32 %v403, %v429
    %v431 = vmul.f32 %v423, %v430
    %v432 = vsub.f32 %v404, %v431
    %v433 = vlaneseq
    %v434 = vshrl.u32 %v433, 7
    %v435 = vsub.s32 0, %v434
    %v436 = vrot.slane %v430, %v435
    %v437 = vmul.f32 %v397, %v436
    %v438 = vmul.f32 %v400, %v436
    %v439 = vlaneseq
    %v440 = vshrl.u32 %v439, 7
    %v441 = vsub.s32 0, %v440
    %v442 = vrot.slane %v432, %v441
    %v443 = vadd.f32 %v437, %v442
    %v444 = vadd.f32 %v438, %v442
    %v445 = vxor.u32 %v443, 2147483648
    %v446 = vxor.u32 %v444, 2147483648
    %v447 = vmul.f32 %v445, 1.442695
    %v448 = vpow.pop %v447
    %v449 = vmul.f32 %v446, 1.442695
    %v450 = vpow.pop %v449
    %v451 = vadd.f32 %v448, 1.0
    %v452 = vadd.f32 %v450, 1.0
    %v453 = vrcp.pop %v451
    %v454 = vmul.f32 1.0, %v453
    %v455 = vrcp.pop %v452
    %v456 = vmul.f32 1.0, %v455
    %s457 = smul.u32 4, 16
    %s458 = smul.u32 %s457, 4
    %s459 = sshll.u32 %s458, 4
    %460 = dma.done [#allocation4], %s459
    %v461 = vld [vmem:[#allocation2] sm:$0xff]
    %v462 = vld [vmem:[#allocation2 + $0x8] sm:$0xff]
    %v463 = vld [vmem:[#allocation2 + $0x10] sm:$0xff]
    %v464 = vld [vmem:[#allocation2 + $0x18] sm:$0xff]
    %v465 = vld [vmem:[#allocation2 + $0x20] sm:$0xff]
    %v466 = vld [vmem:[#allocation2 + $0x28] sm:$0xff]
    %v467 = vld [vmem:[#allocation2 + $0x30] sm:$0xff]
    %v468 = vld [vmem:[#allocation2 + $0x38] sm:$0xff]
    %v469 = vld [vmem:[#allocation2 + $0x40] sm:$0xff]
    %v470 = vld [vmem:[#allocation2 + $0x48] sm:$0xff]
    %v471 = vld [vmem:[#allocation2 + $0x50] sm:$0xff]
    %v472 = vld [vmem:[#allocation2 + $0x58] sm:$0xff]
    %v473 = vld [vmem:[#allocation2 + $0x60] sm:$0xff]
    %v474 = vld [vmem:[#allocation2 + $0x68] sm:$0xff]
    %v475 = vld [vmem:[#allocation2 + $0x70] sm:$0xff]
    %v476 = vld [vmem:[#allocation2 + $0x78] sm:$0xff]
    %v477 = vld [vmem:[#allocation2 + $0x80] sm:$0xff]
    %v478 = vld [vmem:[#allocation2 + $0x88] sm:$0xff]
    %v479 = vld [vmem:[#allocation2 + $0x90] sm:$0xff]
    %v480 = vld [vmem:[#allocation2 + $0x98] sm:$0xff]
    %v481 = vld [vmem:[#allocation2 + $0xa0] sm:$0xff]
    %v482 = vld [vmem:[#allocation2 + $0xa8] sm:$0xff]
    %v483 = vld [vmem:[#allocation2 + $0xb0] sm:$0xff]
    %v484 = vld [vmem:[#allocation2 + $0xb8] sm:$0xff]
    %v485 = vld [vmem:[#allocation2 + $0xc0] sm:$0xff]
    %v486 = vld [vmem:[#allocation2 + $0xc8] sm:$0xff]
    %v487 = vld [vmem:[#allocation2 + $0xd0] sm:$0xff]
    %v488 = vld [vmem:[#allocation2 + $0xd8] sm:$0xff]
    %v489 = vld [vmem:[#allocation2 + $0xe0] sm:$0xff]
    %v490 = vld [vmem:[#allocation2 + $0xe8] sm:$0xff]
    %v491 = vld [vmem:[#allocation2 + $0xf0] sm:$0xff]
    %v492 = vld [vmem:[#allocation2 + $0xf8] sm:$0xff]
    %v493 = vpack.c.bf16 %v456, %v454
    %494 = vmatprep.subr.bf16.mxu0 %v462
    %495 = vmatpush1.bf16.msra.mxu0 %v461
    %496 = vmatprep.subr.bf16.mxu0 %v466
    %497 = vmatpush1.bf16.msra.mxu0 %v465
    %498 = vmatprep.subr.bf16.mxu0 %v470
    %499 = vmatpush1.bf16.msra.mxu0 %v469
    %500 = vmatprep.subr.bf16.mxu0 %v474
    %501 = vmatpush1.bf16.msra.mxu0 %v473
    %502 = vmatprep.subr.bf16.mxu0 %v478
    %503 = vmatpush1.bf16.msra.mxu0 %v477
    %504 = vmatprep.subr.bf16.mxu0 %v482
    %505 = vmatpush1.bf16.msra.mxu0 %v481
    %506 = vmatprep.subr.bf16.mxu0 %v486
    %507 = vmatpush1.bf16.msra.mxu0 %v485
    %508 = vmatprep.subr.bf16.mxu0 %v490
    %509 = vmatpush1.bf16.msra.mxu0 %v489
    %510 = vmatprep.subr.bf16.mxu0 0
    %511 = vmatpush1.bf16.msra.mxu0 0
    %512 = vmatprep.subr.bf16.mxu0 0
    %513 = vmatpush1.bf16.msra.mxu0 0
    %514 = vmatprep.subr.bf16.mxu0 0
    %515 = vmatpush1.bf16.msra.mxu0 0
    %516 = vmatprep.subr.bf16.mxu0 0
    %517 = vmatpush1.bf16.msra.mxu0 0
    %518 = vmatprep.subr.bf16.mxu0 0
    %519 = vmatpush1.bf16.msra.mxu0 0
    %520 = vmatprep.subr.bf16.mxu0 0
    %521 = vmatpush1.bf16.msra.mxu0 0
    %522 = vmatprep.subr.bf16.mxu0 0
    %523 = vmatpush1.bf16.msra.mxu0 0
    %524 = vmatprep.subr.bf16.mxu0 0
    %525 = vmatpush1.bf16.msra.mxu0 0
    %526 = vmatprep.mubr.bf16.mxu0 0
    %527 = vmatmul.mubr.bf16.gmra.mrb[0].mxu0 %v493
    %v528 = vpop.f32.mrb[0].mxu0
    %v529 = vadd.f32 0.0, %v528
    %v530 = vpop.f32.mrb[0].mxu0
    %v531 = vadd.f32 0.0, %v530
    %v532 = vpop.f32.mrb[0].mxu0
    %v533 = vadd.f32 0.0, %v532
    %v534 = vpop.f32.mrb[0].mxu0
    %v535 = vadd.f32 0.0, %v534
    %536 = vdwg.mxu0
    %537 = vmatprep.subr.bf16.mxu0 %v464
    %538 = vmatpush1.bf16.msra.mxu0 %v463
    %539 = vmatprep.subr.bf16.mxu0 %v468
    %540 = vmatpush1.bf16.msra.mxu0 %v467
    %541 = vmatprep.subr.bf16.mxu0 %v472
    %542 = vmatpush1.bf16.msra.mxu0 %v471
    %543 = vmatprep.subr.bf16.mxu0 %v476
    %544 = vmatpush1.bf16.msra.mxu0 %v475
    %545 = vmatprep.subr.bf16.mxu0 %v480
    %546 = vmatpush1.bf16.msra.mxu0 %v479
    %547 = vmatprep.subr.bf16.mxu0 %v484
    %548 = vmatpush1.bf16.msra.mxu0 %v483
    %549 = vmatprep.subr.bf16.mxu0 %v488
    %550 = vmatpush1.bf16.msra.mxu0 %v487
    %551 = vmatprep.subr.bf16.mxu0 %v492
    %552 = vmatpush1.bf16.msra.mxu0 %v491
    %553 = vmatprep.subr.bf16.mxu0 0
    %554 = vmatpush1.bf16.msra.mxu0 0
    %555 = vmatprep.subr.bf16.mxu0 0
    %556 = vmatpush1.bf16.msra.mxu0 0
    %557 = vmatprep.subr.bf16.mxu0 0
    %558 = vmatpush1.bf16.msra.mxu0 0
    %559 = vmatprep.subr.bf16.mxu0 0
    %560 = vmatpush1.bf16.msra.mxu0 0
    %561 = vmatprep.subr.bf16.mxu0 0
    %562 = vmatpush1.bf16.msra.mxu0 0
    %563 = vmatprep.subr.bf16.mxu0 0
    %564 = vmatpush1.bf16.msra.mxu0 0
    %565 = vmatprep.subr.bf16.mxu0 0
    %566 = vmatpush1.bf16.msra.mxu0 0
    %567 = vmatprep.subr.bf16.mxu0 0
    %568 = vmatpush1.bf16.msra.mxu0 0
    %569 = vmatprep.mubr.bf16.mxu0 0
    %570 = vmatmul.mubr.bf16.gmra.mrb[0].mxu0 %v493
    %v571 = vpop.f32.mrb[0].mxu0
    %v572 = vadd.f32 0.0, %v571
    %v573 = vpop.f32.mrb[0].mxu0
    %v574 = vadd.f32 0.0, %v573
    %v575 = vpop.f32.mrb[0].mxu0
    %v576 = vadd.f32 0.0, %v575
    %v577 = vpop.f32.mrb[0].mxu0
    %v578 = vadd.f32 0.0, %v577
    %579 = vdwg.mxu0
    %s580 = scalar_lea.vmem [#allocation11], 4
    %v581 = vld [vmem:[%s580] ss:$2 sm:$0xf]
    %s582 = scalar_lea.vmem [#allocation11], 5
    %v583 = vld [vmem:[%s582] ss:$2 sm:$0xf]
    %v584 = vmul.f32 %v529, %v128
    %v585 = vmul.f32 %v531, %v128
    %v586 = vmul.f32 %v572, %v128
    %v587 = vmul.f32 %v574, %v128
    %v588 = vmul.f32 %v533, %v129
    %v589 = vmul.f32 %v535, %v129
    %v590 = vmul.f32 %v576, %v129
    %v591 = vmul.f32 %v578, %v129
    %v592 = vmul.f32 %v584, %v529
    %v593 = vmul.f32 %v585, %v531
    %v594 = vmul.f32 %v586, %v572
    %v595 = vmul.f32 %v587, %v574
    %v596 = vmul.f32 %v588, %v533
    %v597 = vmul.f32 %v589, %v535
    %v598 = vmul.f32 %v590, %v576
    %v599 = vmul.f32 %v591, %v578
    %v600 = vadd.f32 %v584, %v588
    %v601 = vrot.slane %v600, 4
    %v602 = vadd.f32 %v600, %v601
    %v603 = vrot.slane %v602, 2
    %v604 = vadd.f32 %v602, %v603
    %v605 = vrot.slane %v604, 1
    %v606 = vadd.f32 %v604, %v605
    %v607 = vadd.f32 %v585, %v589
    %v608 = vrot.slane %v607, 4
    %v609 = vadd.f32 %v607, %v608
    %v610 = vrot.slane %v609, 2
    %v611 = vadd.f32 %v609, %v610
    %v612 = vrot.slane %v611, 1
    %v613 = vadd.f32 %v611, %v612
    %v614 = vadd.f32 %v586, %v590
    %v615 = vrot.slane %v614, 4
    %v616 = vadd.f32 %v614, %v615
    %v617 = vrot.slane %v616, 2
    %v618 = vadd.f32 %v616, %v617
    %v619 = vrot.slane %v618, 1
    %v620 = vadd.f32 %v618, %v619
    %v621 = vadd.f32 %v587, %v591
    %v622 = vrot.slane %v621, 4
    %v623 = vadd.f32 %v621, %v622
    %v624 = vrot.slane %v623, 2
    %v625 = vadd.f32 %v623, %v624
    %v626 = vrot.slane %v625, 1
    %v627 = vadd.f32 %v625, %v626
    %v628 = vadd.f32 %v592, %v596
    %v629 = vrot.slane %v628, 4
    %v630 = vadd.f32 %v628, %v629
    %v631 = vrot.slane %v630, 2
    %v632 = vadd.f32 %v630, %v631
    %v633 = vrot.slane %v632, 1
    %v634 = vadd.f32 %v632, %v633
    %v635 = vadd.f32 %v593, %v597
    %v636 = vrot.slane %v635, 4
    %v637 = vadd.f32 %v635, %v636
    %v638 = vrot.slane %v637, 2
    %v639 = vadd.f32 %v637, %v638
    %v640 = vrot.slane %v639, 1
    %v641 = vadd.f32 %v639, %v640
    %v642 = vadd.f32 %v594, %v598
    %v643 = vrot.slane %v642, 4
    %v644 = vadd.f32 %v642, %v643
    %v645 = vrot.slane %v644, 2
    %v646 = vadd.f32 %v644, %v645
    %v647 = vrot.slane %v646, 1
    %v648 = vadd.f32 %v646, %v647
    %v649 = vadd.f32 %v595, %v599
    %v650 = vrot.slane %v649, 4
    %v651 = vadd.f32 %v649, %v650
    %v652 = vrot.slane %v651, 2
    %v653 = vadd.f32 %v651, %v652
    %v654 = vrot.slane %v653, 1
    %v655 = vadd.f32 %v653, %v654
    %v656 = vmul.f32 %v606, 0.25
    %v657 = vmul.f32 %v613, 0.25
    %v658 = vmul.f32 %v620, 0.25
    %v659 = vmul.f32 %v627, 0.25
    %v660 = vmul.f32 %v634, 0.25
    %v661 = vmul.f32 %v641, 0.25
    %v662 = vmul.f32 %v648, 0.25
    %v663 = vmul.f32 %v655, 0.25
    %v664 = vmul.f32 %v656, %v656
    %v665 = vmul.f32 %v657, %v657
    %v666 = vmul.f32 %v658, %v658
    %v667 = vmul.f32 %v659, %v659
    %v668 = vsub.f32 %v660, %v664
    %v669 = vsub.f32 %v661, %v665
    %v670 = vsub.f32 %v662, %v666
    %v671 = vsub.f32 %v663, %v667
    %v672 = vmax.f32 %v668, 0.0
    %v673 = vmax.f32 %v669, 0.0
    %v674 = vmax.f32 %v670, 0.0
    %v675 = vmax.f32 %v671, 0.0
    %v676 = vadd.f32 %v672, 1e-05
    %v677 = vadd.f32 %v673, 1e-05
    %v678 = vadd.f32 %v674, 1e-05
    %v679 = vadd.f32 %v675, 1e-05
    %v680 = vrsqrt.pop %v676
    %v681 = vrsqrt.pop %v677
    %v682 = vrsqrt.pop %v678
    %v683 = vrsqrt.pop %v679
    %v688 = vcombine.low %v680, %v681
    %v689 = vcombine.low %v682, %v683
    %v691 = vunpack.c.l.s4 1966171168
    %v692 = vunpack.c.0.s8 %v691
    %v693 = vlaneseq
    %v694 = vshrl.u32 %v693, 7
    %v695 = vsub.s32 %v692, %v694
    %v696 = vrot.slane %v688, %v695
    %v698 = vunpack.c.l.s4 1966171168
    %v699 = vunpack.c.0.s8 %v698
    %v700 = vlaneseq
    %v701 = vshrl.u32 %v700, 7
    %v702 = vsub.s32 %v699, %v701
    %v703 = vrot.slane %v689, %v702
    %v704 = vcombine.low %v696, %v703
    %v706 = vunpack.c.l.s4 1966171168
    %v707 = vunpack.c.0.s8 %v706
    %v708 = vlaneseq
    %v709 = vshrl.u32 %v708, 7
    %v710 = vsub.s32 %v707, %v709
    %v711 = vrot.slane %v704, %v710
    %v713 = vmul.f32 %v581, %v711
    %v715 = vlaneseq
    %v716 = vshrl.u32 %v715, 7
    %v717 = vsub.s32 0, %v716
    %v718 = vrot.slane %v713, %v717
    %v719 = vlaneseq
    %v720 = vshrl.u32 %v719, 7
    %v721 = vsub.s32 1, %v720
    %v722 = vrot.slane %v713, %v721
    %v723 = vlaneseq
    %v724 = vshrl.u32 %v723, 7
    %v725 = vsub.s32 2, %v724
    %v726 = vrot.slane %v713, %v725
    %v727 = vlaneseq
    %v728 = vshrl.u32 %v727, 7
    %v729 = vsub.s32 3, %v728
    %v730 = vrot.slane %v713, %v729
    %v735 = vmul.f32 %v656, %v718
    %v736 = vmul.f32 %v657, %v722
    %v737 = vmul.f32 %v658, %v726
    %v738 = vmul.f32 %v659, %v730
    %v743 = vcombine.low %v735, %v736
    %v744 = vcombine.low %v737, %v738
    %v746 = vunpack.c.l.s4 1966171168
    %v747 = vunpack.c.0.s8 %v746
    %v748 = vlaneseq
    %v749 = vshrl.u32 %v748, 7
    %v750 = vsub.s32 %v747, %v749
    %v751 = vrot.slane %v743, %v750
    %v753 = vunpack.c.l.s4 1966171168
    %v754 = vunpack.c.0.s8 %v753
    %v755 = vlaneseq
    %v756 = vshrl.u32 %v755, 7
    %v757 = vsub.s32 %v754, %v756
    %v758 = vrot.slane %v744, %v757
    %v759 = vcombine.low %v751, %v758
    %v761 = vunpack.c.l.s4 1966171168
    %v762 = vunpack.c.0.s8 %v761
    %v763 = vlaneseq
    %v764 = vshrl.u32 %v763, 7
    %v765 = vsub.s32 %v762, %v764
    %v766 = vrot.slane %v759, %v765
    %v768 = vsub.f32 %v583, %v766
    %v769 = vmul.f32 %v529, %v718
    %v770 = vmul.f32 %v531, %v722
    %v771 = vmul.f32 %v572, %v726
    %v772 = vmul.f32 %v574, %v730
    %v773 = vmul.f32 %v533, %v718
    %v774 = vmul.f32 %v535, %v722
    %v775 = vmul.f32 %v576, %v726
    %v776 = vmul.f32 %v578, %v730
    %v778 = vlaneseq
    %v779 = vshrl.u32 %v778, 7
    %v780 = vsub.s32 0, %v779
    %v781 = vrot.slane %v768, %v780
    %v782 = vlaneseq
    %v783 = vshrl.u32 %v782, 7
    %v784 = vsub.s32 1, %v783
    %v785 = vrot.slane %v768, %v784
    %v786 = vlaneseq
    %v787 = vshrl.u32 %v786, 7
    %v788 = vsub.s32 2, %v787
    %v789 = vrot.slane %v768, %v788
    %v790 = vlaneseq
    %v791 = vshrl.u32 %v790, 7
    %v792 = vsub.s32 3, %v791
    %v793 = vrot.slane %v768, %v792
    %v798 = vadd.f32 %v769, %v781
    %v799 = vadd.f32 %v770, %v785
    %v800 = vadd.f32 %v771, %v789
    %v801 = vadd.f32 %v772, %v793
    %v802 = vadd.f32 %v773, %v781
    %v803 = vadd.f32 %v774, %v785
    %v804 = vadd.f32 %v775, %v789
    %v805 = vadd.f32 %v776, %v793
    %v806 = vxor.u32 %v798, 2147483648
    %v807 = vxor.u32 %v799, 2147483648
    %v808 = vxor.u32 %v800, 2147483648
    %v809 = vxor.u32 %v801, 2147483648
    %v810 = vxor.u32 %v802, 2147483648
    %v811 = vxor.u32 %v803, 2147483648
    %v812 = vxor.u32 %v804, 2147483648
    %v813 = vxor.u32 %v805, 2147483648
    %v814 = vmul.f32 %v806, 1.442695
    %v815 = vpow.pop %v814
    %v816 = vmul.f32 %v807, 1.442695
    %v817 = vpow.pop %v816
    %v818 = vmul.f32 %v808, 1.442695
    %v819 = vpow.pop %v818
    %v820 = vmul.f32 %v809, 1.442695
    %v821 = vpow.pop %v820
    %v822 = vmul.f32 %v810, 1.442695
    %v823 = vpow.pop %v822
    %v824 = vmul.f32 %v811, 1.442695
    %v825 = vpow.pop %v824
    %v826 = vmul.f32 %v812, 1.442695
    %v827 = vpow.pop %v826
    %v828 = vmul.f32 %v813, 1.442695
    %v829 = vpow.pop %v828
    %v830 = vadd.f32 %v815, 1.0
    %v831 = vadd.f32 %v817, 1.0
    %v832 = vadd.f32 %v819, 1.0
    %v833 = vadd.f32 %v821, 1.0
    %v834 = vadd.f32 %v823, 1.0
    %v835 = vadd.f32 %v825, 1.0
    %v836 = vadd.f32 %v827, 1.0
    %v837 = vadd.f32 %v829, 1.0
    %v838 = vrcp.pop %v830
    %v839 = vmul.f32 1.0, %v838
    %v840 = vrcp.pop %v831
    %v841 = vmul.f32 1.0, %v840
    %v842 = vrcp.pop %v832
    %v843 = vmul.f32 1.0, %v842
    %v844 = vrcp.pop %v833
    %v845 = vmul.f32 1.0, %v844
    %v846 = vrcp.pop %v834
    %v847 = vmul.f32 1.0, %v846
    %v848 = vrcp.pop %v835
    %v849 = vmul.f32 1.0, %v848
    %v850 = vrcp.pop %v836
    %v851 = vmul.f32 1.0, %v850
    %v852 = vrcp.pop %v837
    %v853 = vmul.f32 1.0, %v852
    %v854 = vld [vmem:[#allocation5] sm:$0xff]
    %v855 = vld [vmem:[#allocation5 + $0x8] sm:$0xff]
    %v856 = vld [vmem:[#allocation5 + $0x10] sm:$0xff]
    %v857 = vld [vmem:[#allocation5 + $0x18] sm:$0xff]
    %v858 = vunpack.c.l.bf16 %v854
    %v859 = vunpack.c.h.bf16 %v854
    %v860 = vunpack.c.l.bf16 %v855
    %v861 = vunpack.c.h.bf16 %v855
    %v862 = vunpack.c.l.bf16 %v856
    %v863 = vunpack.c.h.bf16 %v856
    %v864 = vunpack.c.l.bf16 %v857
    %v865 = vunpack.c.h.bf16 %v857
    %v866 = vmul.f32 %v858, %v839
    %v867 = vmul.f32 %v859, %v841
    %v868 = vmul.f32 %v860, %v843
    %v869 = vmul.f32 %v861, %v845
    %v870 = vmul.f32 %v862, %v847
    %v871 = vmul.f32 %v863, %v849
    %v872 = vmul.f32 %v864, %v851
    %v873 = vmul.f32 %v865, %v853
    %s874 = smul.u32 4, 96
    %s875 = smul.u32 %s874, 1
    %s876 = sshll.u32 %s875, 4
    %877 = dma.done %s109, %s876
    %v878 = vld [vmem:[#allocation3] sm:$0xff]
    %v879 = vld [vmem:[#allocation3 + $0x8] sm:$0xff]
    %v880 = vld [vmem:[#allocation3 + $0x10] sm:$0xff]
    %v881 = vld [vmem:[#allocation3 + $0x18] sm:$0xff]
    %v882 = vld [vmem:[#allocation3 + $0x20] sm:$0xff]
    %v883 = vld [vmem:[#allocation3 + $0x28] sm:$0xff]
    %v884 = vld [vmem:[#allocation3 + $0x30] sm:$0xff]
    %v885 = vld [vmem:[#allocation3 + $0x38] sm:$0xff]
    %v886 = vld [vmem:[#allocation3 + $0x40] sm:$0xff]
    %v887 = vld [vmem:[#allocation3 + $0x48] sm:$0xff]
    %v888 = vld [vmem:[#allocation3 + $0x50] sm:$0xff]
    %v889 = vld [vmem:[#allocation3 + $0x58] sm:$0xff]
    %v890 = vld [vmem:[#allocation3 + $0x60] sm:$0xff]
    %v891 = vld [vmem:[#allocation3 + $0x68] sm:$0xff]
    %v892 = vld [vmem:[#allocation3 + $0x70] sm:$0xff]
    %v893 = vld [vmem:[#allocation3 + $0x78] sm:$0xff]
    %v894 = vld [vmem:[#allocation3 + $0x80] sm:$0xff]
    %v895 = vld [vmem:[#allocation3 + $0x88] sm:$0xff]
    %v896 = vld [vmem:[#allocation3 + $0x90] sm:$0xff]
    %v897 = vld [vmem:[#allocation3 + $0x98] sm:$0xff]
    %v898 = vld [vmem:[#allocation3 + $0xa0] sm:$0xff]
    %v899 = vld [vmem:[#allocation3 + $0xa8] sm:$0xff]
    %v900 = vld [vmem:[#allocation3 + $0xb0] sm:$0xff]
    %v901 = vld [vmem:[#allocation3 + $0xb8] sm:$0xff]
    %v902 = vld [vmem:[#allocation3 + $0xc0] sm:$0xff]
    %v903 = vld [vmem:[#allocation3 + $0xc8] sm:$0xff]
    %v904 = vld [vmem:[#allocation3 + $0xd0] sm:$0xff]
    %v905 = vld [vmem:[#allocation3 + $0xd8] sm:$0xff]
    %v906 = vld [vmem:[#allocation3 + $0xe0] sm:$0xff]
    %v907 = vld [vmem:[#allocation3 + $0xe8] sm:$0xff]
    %v908 = vld [vmem:[#allocation3 + $0xf0] sm:$0xff]
    %v909 = vld [vmem:[#allocation3 + $0xf8] sm:$0xff]
    %v910 = vpack.c.bf16 %v870, %v866
    %v911 = vpack.c.bf16 %v871, %v867
    %v912 = vpack.c.bf16 %v872, %v868
    %v913 = vpack.c.bf16 %v873, %v869
    %914 = vmatprep.subr.bf16.mxu0 0
    %915 = vmatpush1.bf16.msra.mxu0 %v878
    %916 = vmatprep.subr.bf16.mxu0 0
    %917 = vmatpush1.bf16.msra.mxu0 %v879
    %918 = vmatprep.subr.bf16.mxu0 0
    %919 = vmatpush1.bf16.msra.mxu0 %v880
    %920 = vmatprep.subr.bf16.mxu0 0
    %921 = vmatpush1.bf16.msra.mxu0 %v881
    %922 = vmatprep.subr.bf16.mxu0 0
    %923 = vmatpush1.bf16.msra.mxu0 %v882
    %924 = vmatprep.subr.bf16.mxu0 0
    %925 = vmatpush1.bf16.msra.mxu0 %v883
    %926 = vmatprep.subr.bf16.mxu0 0
    %927 = vmatpush1.bf16.msra.mxu0 %v884
    %928 = vmatprep.subr.bf16.mxu0 0
    %929 = vmatpush1.bf16.msra.mxu0 %v885
    %930 = vmatprep.subr.bf16.mxu0 0
    %931 = vmatpush1.bf16.msra.mxu0 %v886
    %932 = vmatprep.subr.bf16.mxu0 0
    %933 = vmatpush1.bf16.msra.mxu0 %v887
    %934 = vmatprep.subr.bf16.mxu0 0
    %935 = vmatpush1.bf16.msra.mxu0 %v888
    %936 = vmatprep.subr.bf16.mxu0 0
    %937 = vmatpush1.bf16.msra.mxu0 %v889
    %938 = vmatprep.subr.bf16.mxu0 0
    %939 = vmatpush1.bf16.msra.mxu0 %v890
    %940 = vmatprep.subr.bf16.mxu0 0
    %941 = vmatpush1.bf16.msra.mxu0 %v891
    %942 = vmatprep.subr.bf16.mxu0 0
    %943 = vmatpush1.bf16.msra.mxu0 %v892
    %944 = vmatprep.subr.bf16.mxu0 0
    %945 = vmatpush1.bf16.msra.mxu0 %v893
    %946 = vmatprep.mubr.bf16.mxu0 %v911
    %947 = vmatmul.mubr.bf16.gmra.mrb[0].mxu0 %v910
    %v948 = vpop.f32.mrb[0].mxu0
    %v949 = vadd.f32 0.0, %v948
    %v950 = vpop.f32.mrb[0].mxu0
    %v951 = vpop.f32.mrb[0].mxu0
    %v952 = vadd.f32 0.0, %v951
    %v953 = vpop.f32.mrb[0].mxu0
    %954 = vdwg.mxu0
    %955 = vmatprep.subr.bf16.mxu0 0
    %956 = vmatpush1.bf16.msra.mxu0 %v894
    %957 = vmatprep.subr.bf16.mxu0 0
    %958 = vmatpush1.bf16.msra.mxu0 %v895
    %959 = vmatprep.subr.bf16.mxu0 0
    %960 = vmatpush1.bf16.msra.mxu0 %v896
    %961 = vmatprep.subr.bf16.mxu0 0
    %962 = vmatpush1.bf16.msra.mxu0 %v897
    %963 = vmatprep.subr.bf16.mxu0 0
    %964 = vmatpush1.bf16.msra.mxu0 %v898
    %965 = vmatprep.subr.bf16.mxu0 0
    %966 = vmatpush1.bf16.msra.mxu0 %v899
    %967 = vmatprep.subr.bf16.mxu0 0
    %968 = vmatpush1.bf16.msra.mxu0 %v900
    %969 = vmatprep.subr.bf16.mxu0 0
    %970 = vmatpush1.bf16.msra.mxu0 %v901
    %971 = vmatprep.subr.bf16.mxu0 0
    %972 = vmatpush1.bf16.msra.mxu0 %v902
    %973 = vmatprep.subr.bf16.mxu0 0
    %974 = vmatpush1.bf16.msra.mxu0 %v903
    %975 = vmatprep.subr.bf16.mxu0 0
    %976 = vmatpush1.bf16.msra.mxu0 %v904
    %977 = vmatprep.subr.bf16.mxu0 0
    %978 = vmatpush1.bf16.msra.mxu0 %v905
    %979 = vmatprep.subr.bf16.mxu0 0
    %980 = vmatpush1.bf16.msra.mxu0 %v906
    %981 = vmatprep.subr.bf16.mxu0 0
    %982 = vmatpush1.bf16.msra.mxu0 %v907
    %983 = vmatprep.subr.bf16.mxu0 0
    %984 = vmatpush1.bf16.msra.mxu0 %v908
    %985 = vmatprep.subr.bf16.mxu0 0
    %986 = vmatpush1.bf16.msra.mxu0 %v909
    %987 = vmatprep.mubr.bf16.mxu0 %v913
    %988 = vmatmul.mubr.bf16.gmra.mrb[0].mxu0 %v912
    %v989 = vpop.f32.mrb[0].mxu0
    %v990 = vadd.f32 %v949, %v989
    %v991 = vpop.f32.mrb[0].mxu0
    %v992 = vpop.f32.mrb[0].mxu0
    %v993 = vadd.f32 %v952, %v992
    %v994 = vpop.f32.mrb[0].mxu0
    %995 = vdwg.mxu0
    %v996 = vld [vmem:[#allocation11 + $0xc] sm:$0x1]
    %v997 = vld [vmem:[#allocation11 + $0xd] sm:$0x1]
    %v998 = vmul.f32 %v990, %v128
    %v999 = vmul.f32 %v993, %v129
    %v1000 = vmul.f32 %v998, %v990
    %v1001 = vmul.f32 %v999, %v993
    %v1002 = vadd.f32 %v998, %v999
    %v1003 = vrot.slane %v1002, 4
    %v1004 = vadd.f32 %v1002, %v1003
    %v1005 = vrot.slane %v1004, 2
    %v1006 = vadd.f32 %v1004, %v1005
    %v1007 = vrot.slane %v1006, 1
    %v1008 = vadd.f32 %v1006, %v1007
    %v1009 = vadd.f32 %v1000, %v1001
    %v1010 = vrot.slane %v1009, 4
    %v1011 = vadd.f32 %v1009, %v1010
    %v1012 = vrot.slane %v1011, 2
    %v1013 = vadd.f32 %v1011, %v1012
    %v1014 = vrot.slane %v1013, 1
    %v1015 = vadd.f32 %v1013, %v1014
    %v1016 = vmul.f32 %v1008, 0.25
    %v1017 = vmul.f32 %v1015, 0.25
    %v1018 = vmul.f32 %v1016, %v1016
    %v1019 = vsub.f32 %v1017, %v1018
    %v1020 = vmax.f32 %v1019, 0.0
    %v1021 = vadd.f32 %v1020, 1e-05
    %v1022 = vrsqrt.pop %v1021
    %v1023 = vmul.f32 %v996, %v1022
    %v1024 = vmul.f32 %v1016, %v1023
    %v1025 = vsub.f32 %v997, %v1024
    %v1026 = vlaneseq
    %v1027 = vshrl.u32 %v1026, 7
    %v1028 = vsub.s32 0, %v1027
    %v1029 = vrot.slane %v1023, %v1028
    %v1030 = vmul.f32 %v990, %v1029
    %v1031 = vmul.f32 %v993, %v1029
    %v1032 = vlaneseq
    %v1033 = vshrl.u32 %v1032, 7
    %v1034 = vsub.s32 0, %v1033
    %v1035 = vrot.slane %v1025, %v1034
    %v1036 = vadd.f32 %v1030, %v1035
    %v1037 = vadd.f32 %v1031, %v1035
    %v1038 = vmax.f32 %v1036, 0.0
    %v1039 = vmax.f32 %v1037, 0.0
    %v1040 = vmul.f32 %v1038, %v454
    %v1041 = vmul.f32 %v1039, %v456
    %v1042 = vld [vmem:[#allocation3 + $0x100] sm:$0xff]
    %v1043 = vld [vmem:[#allocation3 + $0x108] sm:$0xff]
    %v1044 = vld [vmem:[#allocation3 + $0x110] sm:$0xff]
    %v1045 = vld [vmem:[#allocation3 + $0x118] sm:$0xff]
    %v1046 = vld [vmem:[#allocation3 + $0x120] sm:$0xff]
    %v1047 = vld [vmem:[#allocation3 + $0x128] sm:$0xff]
    %v1048 = vld [vmem:[#allocation3 + $0x130] sm:$0xff]
    %v1049 = vld [vmem:[#allocation3 + $0x138] sm:$0xff]
    %v1050 = vpack.c.bf16 %v1041, %v1040
    %1051 = vmatprep.subr.bf16.mxu0 0
    %1052 = vmatpush1.bf16.msra.mxu0 %v1042
    %1053 = vmatprep.subr.bf16.mxu0 0
    %1054 = vmatpush1.bf16.msra.mxu0 %v1043
    %1055 = vmatprep.subr.bf16.mxu0 0
    %1056 = vmatpush1.bf16.msra.mxu0 %v1044
    %1057 = vmatprep.subr.bf16.mxu0 0
    %1058 = vmatpush1.bf16.msra.mxu0 %v1045
    %1059 = vmatprep.subr.bf16.mxu0 0
    %1060 = vmatpush1.bf16.msra.mxu0 %v1046
    %1061 = vmatprep.subr.bf16.mxu0 0
    %1062 = vmatpush1.bf16.msra.mxu0 %v1047
    %1063 = vmatprep.subr.bf16.mxu0 0
    %1064 = vmatpush1.bf16.msra.mxu0 %v1048
    %1065 = vmatprep.subr.bf16.mxu0 0
    %1066 = vmatpush1.bf16.msra.mxu0 %v1049
    %1067 = vmatprep.subr.bf16.mxu0 0
    %1068 = vmatpush1.bf16.msra.mxu0 0
    %1069 = vmatprep.subr.bf16.mxu0 0
    %1070 = vmatpush1.bf16.msra.mxu0 0
    %1071 = vmatprep.subr.bf16.mxu0 0
    %1072 = vmatpush1.bf16.msra.mxu0 0
    %1073 = vmatprep.subr.bf16.mxu0 0
    %1074 = vmatpush1.bf16.msra.mxu0 0
    %1075 = vmatprep.subr.bf16.mxu0 0
    %1076 = vmatpush1.bf16.msra.mxu0 0
    %1077 = vmatprep.subr.bf16.mxu0 0
    %1078 = vmatpush1.bf16.msra.mxu0 0
    %1079 = vmatprep.subr.bf16.mxu0 0
    %1080 = vmatpush1.bf16.msra.mxu0 0
    %1081 = vmatprep.subr.bf16.mxu0 0
    %1082 = vmatpush1.bf16.msra.mxu0 0
    %1083 = vmatprep.mubr.bf16.mxu0 0
    %1084 = vmatmul.mubr.bf16.gmra.mrb[0].mxu0 %v1050
    %v1085 = vpop.f32.mrb[0].mxu0
    %v1086 = vadd.f32 0.0, %v1085
    %v1087 = vpop.f32.mrb[0].mxu0
    %v1088 = vpop.f32.mrb[0].mxu0
    %v1089 = vadd.f32 0.0, %v1088
    %v1090 = vpop.f32.mrb[0].mxu0
    %1091 = vdwg.mxu0
    %v1092 = vld [vmem:[#allocation11 + $0xe] sm:$0x1]
    %v1093 = vld [vmem:[#allocation11 + $0xf] sm:$0x1]
    %v1094 = vmul.f32 %v1086, %v128
    %v1095 = vmul.f32 %v1089, %v129
    %v1096 = vmul.f32 %v1094, %v1086
    %v1097 = vmul.f32 %v1095, %v1089
    %v1098 = vadd.f32 %v1094, %v1095
    %v1099 = vrot.slane %v1098, 4
    %v1100 = vadd.f32 %v1098, %v1099
    %v1101 = vrot.slane %v1100, 2
    %v1102 = vadd.f32 %v1100, %v1101
    %v1103 = vrot.slane %v1102, 1
    %v1104 = vadd.f32 %v1102, %v1103
    %v1105 = vadd.f32 %v1096, %v1097
    %v1106 = vrot.slane %v1105, 4
    %v1107 = vadd.f32 %v1105, %v1106
    %v1108 = vrot.slane %v1107, 2
    %v1109 = vadd.f32 %v1107, %v1108
    %v1110 = vrot.slane %v1109, 1
    %v1111 = vadd.f32 %v1109, %v1110
    %v1112 = vmul.f32 %v1104, 0.25
    %v1113 = vmul.f32 %v1111, 0.25
    %v1114 = vmul.f32 %v1112, %v1112
    %v1115 = vsub.f32 %v1113, %v1114
    %v1116 = vmax.f32 %v1115, 0.0
    %v1117 = vadd.f32 %v1116, 1e-05
    %v1118 = vrsqrt.pop %v1117
    %v1119 = vmul.f32 %v1092, %v1118
    %v1120 = vmul.f32 %v1112, %v1119
    %v1121 = vsub.f32 %v1093, %v1120
    %v1122 = vlaneseq
    %v1123 = vshrl.u32 %v1122, 7
    %v1124 = vsub.s32 0, %v1123
    %v1125 = vrot.slane %v1119, %v1124
    %v1126 = vmul.f32 %v1086, %v1125
    %v1127 = vmul.f32 %v1089, %v1125
    %v1128 = vlaneseq
    %v1129 = vshrl.u32 %v1128, 7
    %v1130 = vsub.s32 0, %v1129
    %v1131 = vrot.slane %v1121, %v1130
    %v1132 = vadd.f32 %v1126, %v1131
    %v1133 = vadd.f32 %v1127, %v1131
    %v1134 = vmax.f32 %v1132, 0.0
    %v1135 = vmax.f32 %v1133, 0.0
    %v1136 = vmul.f32 %v1134, %v294
    %v1137 = vmul.f32 %v1135, %v296
    %v1138 = vld [vmem:[#allocation3 + $0x140] sm:$0xff]
    %v1139 = vld [vmem:[#allocation3 + $0x148] sm:$0xff]
    %v1140 = vld [vmem:[#allocation3 + $0x150] sm:$0xff]
    %v1141 = vld [vmem:[#allocation3 + $0x158] sm:$0xff]
    %v1142 = vld [vmem:[#allocation3 + $0x160] sm:$0xff]
    %v1143 = vld [vmem:[#allocation3 + $0x168] sm:$0xff]
    %v1144 = vld [vmem:[#allocation3 + $0x170] sm:$0xff]
    %v1145 = vld [vmem:[#allocation3 + $0x178] sm:$0xff]
    %v1146 = vpack.c.bf16 %v1137, %v1136
    %1147 = vmatprep.subr.bf16.mxu0 0
    %1148 = vmatpush1.bf16.msra.mxu0 %v1138
    %1149 = vmatprep.subr.bf16.mxu0 0
    %1150 = vmatpush1.bf16.msra.mxu0 %v1139
    %1151 = vmatprep.subr.bf16.mxu0 0
    %1152 = vmatpush1.bf16.msra.mxu0 %v1140
    %1153 = vmatprep.subr.bf16.mxu0 0
    %1154 = vmatpush1.bf16.msra.mxu0 %v1141
    %1155 = vmatprep.subr.bf16.mxu0 0
    %1156 = vmatpush1.bf16.msra.mxu0 %v1142
    %1157 = vmatprep.subr.bf16.mxu0 0
    %1158 = vmatpush1.bf16.msra.mxu0 %v1143
    %1159 = vmatprep.subr.bf16.mxu0 0
    %1160 = vmatpush1.bf16.msra.mxu0 %v1144
    %1161 = vmatprep.subr.bf16.mxu0 0
    %1162 = vmatpush1.bf16.msra.mxu0 %v1145
    %1163 = vmatprep.subr.bf16.mxu0 0
    %1164 = vmatpush1.bf16.msra.mxu0 0
    %1165 = vmatprep.subr.bf16.mxu0 0
    %1166 = vmatpush1.bf16.msra.mxu0 0
    %1167 = vmatprep.subr.bf16.mxu0 0
    %1168 = vmatpush1.bf16.msra.mxu0 0
    %1169 = vmatprep.subr.bf16.mxu0 0
    %1170 = vmatpush1.bf16.msra.mxu0 0
    %1171 = vmatprep.subr.bf16.mxu0 0
    %1172 = vmatpush1.bf16.msra.mxu0 0
    %1173 = vmatprep.subr.bf16.mxu0 0
    %1174 = vmatpush1.bf16.msra.mxu0 0
    %1175 = vmatprep.subr.bf16.mxu0 0
    %1176 = vmatpush1.bf16.msra.mxu0 0
    %1177 = vmatprep.subr.bf16.mxu0 0
    %1178 = vmatpush1.bf16.msra.mxu0 0
    %1179 = vmatprep.mubr.bf16.mxu0 0
    %1180 = vmatmul.mubr.bf16.gmra.mrb[0].mxu0 %v1146
    %v1181 = vpop.f32.mrb[0].mxu0
    %v1182 = vadd.f32 0.0, %v1181
    %v1183 = vpop.f32.mrb[0].mxu0
    %v1184 = vpop.f32.mrb[0].mxu0
    %v1185 = vadd.f32 0.0, %v1184
    %v1186 = vpop.f32.mrb[0].mxu0
    %1187 = vdwg.mxu0
    %1188 = vst [vmem:[#allocation13] sm:$0xff] %v1182
    %1189 = vst [vmem:[#allocation13 + $0x8] sm:$0xff] %v1185
    // Predicated region
    $region38: #{tpu_custom_call.1} parent=1 // pred_check
      _
    $region39: #{tpu_custom_call.1} parent=1 // pred_check_branch
      %1191 = sbr.rel (0) target = $region41
    $region40: #{tpu_custom_call.1} parent=1 // pred_region
      %s1193 = ssub.s32 256, 256
      %1194 = vsyncadd [#allocation7], %s1193
      %s1195 = sshll.u32 [#allocation13], 4
      %s1196 = int_to_ptr.vmem [resolvable:$true] %s1195
      %1201 = dma.vmem_to_hbm [thread:$0]  %s1196, 256, %s6, [#allocation7], 128, 128, 8
    $region41: #{tpu_custom_call.1} parent=1 // pred_fallthru
      _
    // Predicated region
    $region42: #{tpu_custom_call.1} parent=1 // pred_check
      _
    $region43: #{tpu_custom_call.1} parent=1 // pred_check_branch
      %1203 = sbr.rel (0) target = $region45
    $region44: #{tpu_custom_call.1} parent=1 // pred_region
      %1204 = dma.done [#allocation7], 256
    $region45: #{tpu_custom_call.1} parent=1 // pred_fallthru
      _
    %1205 = vsyncpa [#allocation6], 1
    %1206 = vsyncpa [#allocation9], 1
    %1207 = vsyncpa [#allocation12], 1
    %1208 = vsyncpa [#allocation7], 1
  %1209 = vsyncmov [#allocation4]
  %s1210 = vpop.sfrf %1209
  %p1211 = scmp.eq.s32.totalorder %s1210, 0
  %p1212 = pneg %p1211
  %1214 = shalt.err (%p1212)
  %s1215 = scalar_lea.sflag [#allocation4], 1
  %1216 = vsyncmov %s1215
  %s1217 = vpop.sfrf %1216
  %p1218 = scmp.eq.s32.totalorder %s1217, 0
  %p1219 = pneg %p1218
  %1221 = shalt.err (%p1219)

</llo_original>
